<compile_context>
chip_gen: v7x
topology: tpu7x:2x2x1
jax: 0.10.0
libtpu: 0.0.40
codegen_flags: <defaults>
</compile_context>

<pallas_src>
import jax
import jax.numpy as jnp
from jax.experimental import pallas as pl
from jax.experimental.pallas import tpu as pltpu


def highway_kernel(x_ref, w_ref, b_ref, o_ref):
    # x_ref: (1, C, tL) activation tile (any float dtype; compute is f32).
    # w_ref: (n_layers, 2C, C) bf16 packed weights, rows [0:C) = gate, [C:2C) = linear.
    # b_ref: (n_layers, 2C, 1) f32 packed biases (same row order).
    C = x_ref.shape[1]
    n_layers = w_ref.shape[0]

    def layer_step(i, x):
        # One fused MXU matmul per layer: (2C, C) @ (C, tL) -> (2C, tL), f32 accumulation.
        y = jnp.dot(w_ref[i], x.astype(jnp.bfloat16),
                    preferred_element_type=jnp.float32)
        y = y + b_ref[i]                                  # (2C, tL) + (2C, 1) lane-broadcast
        g = y[:C]                                         # gate pre-activation (row split is
        nonlinear = y[C:]                                 # sublane-aligned: C % 8 == 0)
        # sigmoid(g) = 1 / (1 + exp(-g)): exp on EUP, approx reciprocal on EUP -> no VALU divide.
        gate = pl.reciprocal(1.0 + jnp.exp(-g), approx=True)
        # TODO(synk): training-mode dropout (p=0.1) omitted; matches eval() semantics.
        return x + gate * (nonlinear - x)                 # == gate*nl + (1-gate)*x, one mul fewer

    x = x_ref[0].astype(jnp.float32)                      # (C, tL), f32 residual path
    if n_layers <= 4:
        for i in range(n_layers):                         # small static count -> unrolled
            x = layer_step(i, x)
    else:
        # Deep stacks: visible loop bounds live ranges / code size; dynamic layer indexing.
        x = jax.lax.fori_loop(0, n_layers, layer_step, x)
    o_ref[0] = x.astype(o_ref.dtype)


def highway_pallas(x_ncl, w_lin, b_lin, w_gate, b_gate, tl=2048):
    """Highway forward.

    x_ncl:  (N, C, L)                       activations, Conv1d NCL layout (f32 or bf16).
    w_lin:  (n_layers, C, C)  (C_out, C_in) linear-branch 1x1-conv weights.
    b_lin:  (n_layers, C)                   linear-branch biases.
    w_gate: (n_layers, C, C)  (C_out, C_in) gate-branch weights.
    b_gate: (n_layers, C)                   gate-branch biases.
    tl:     lane tile along L (multiple of 128; big tiles amortize per-grid-step overhead).
    """
    N, C, L = x_ncl.shape
    n_layers = w_lin.shape[0]
    assert w_lin.shape == (n_layers, C, C) and w_gate.shape == (n_layers, C, C)
    assert b_lin.shape == (n_layers, C) and b_gate.shape == (n_layers, C)
    assert tl % 128 == 0 and tl >= 128, "lane tile must be a multiple of 128"
    assert C % 8 == 0, "channel count must be sublane-aligned (multiple of 8)"

    # Fuse gate + linear into one matmul per layer (gate rows first). Weights go to bf16 for
    # the MXU; biases stay f32 with a trailing lane-broadcast axis.
    w_packed = jnp.concatenate([w_gate, w_lin], axis=1).astype(jnp.bfloat16)           # (nl, 2C, C)
    b_packed = jnp.concatenate([b_gate, b_lin], axis=1).astype(jnp.float32)[..., None]  # (nl, 2C, 1)

    # Lane-dense tiling on L. No padding / slicing in HBM: Pallas masks the ragged last block.
    tl_eff = min(tl, pl.cdiv(L, 128) * 128)               # don't over-tile tiny L
    if N * pl.cdiv(L, tl_eff) < 2 and L > 128:
        # Keep >= 2 grid steps so both v7x TensorCores get work ("parallel" axes shard).
        tl_eff = pl.cdiv(pl.cdiv(L, 2), 128) * 128
    num_l_tiles = pl.cdiv(L, tl_eff)

    return pl.pallas_call(
        highway_kernel,
        out_shape=jax.ShapeDtypeStruct((N, C, L), x_ncl.dtype),
        grid_spec=pltpu.PrefetchScalarGridSpec(
            num_scalar_prefetch=0,
            grid=(N, num_l_tiles),
            in_specs=[
                pl.BlockSpec((1, C, tl_eff), lambda n, l: (n, 0, l)),
                pl.BlockSpec((n_layers, 2 * C, C), lambda n, l: (0, 0, 0)),
                pl.BlockSpec((n_layers, 2 * C, 1), lambda n, l: (0, 0, 0)),
            ],
            out_specs=pl.BlockSpec((1, C, tl_eff), lambda n, l: (n, 0, l)),
        ),
        compiler_params=pltpu.CompilerParams(
            dimension_semantics=("parallel", "parallel"),
        ),
    )(x_ncl, w_packed, b_packed)


def highway_ref(x_ncl, w_lin, b_lin, w_gate, b_gate, mxu_dtype=jnp.float32):
    """Pure-JAX reference (eval mode). mxu_dtype lets us mirror the kernel's bf16 matmul inputs."""
    x = x_ncl.astype(jnp.float32)
    for i in range(w_lin.shape[0]):
        xd = x.astype(mxu_dtype)
        wg = w_gate[i].astype(mxu_dtype)
        wl = w_lin[i].astype(mxu_dtype)
        g = jnp.einsum("oc,ncl->nol", wg, xd,
                       preferred_element_type=jnp.float32,
                       precision=jax.lax.Precision.HIGHEST) + b_gate[i][None, :, None]
        nl = jnp.einsum("oc,ncl->nol", wl, xd,
                        preferred_element_type=jnp.float32,
                        precision=jax.lax.Precision.HIGHEST) + b_lin[i][None, :, None]
        g = jax.nn.sigmoid(g)
        x = g * nl + (1.0 - g) * x
    return x.astype(x_ncl.dtype)


def xavier_uniform(key, shape):
    # Conv1d weight shape (out, in, 1): fan_in = in, fan_out = out.
    fan_out, fan_in = shape[0], shape[1]
    bound = (6.0 / (fan_in + fan_out)) ** 0.5
    return jax.random.uniform(key, shape, jnp.float32, -bound, bound)


def make_params(key, layer_num, size):
    """Deterministic params mirroring the PyTorch module init (Conv1d (out,in) orientation)."""
    keys = jax.random.split(key, 4 * layer_num)
    bbound = 1.0 / (size ** 0.5)     # PyTorch Conv1d bias init bound
    w_lin, b_lin, w_gate, b_gate = [], [], [], []
    for i in range(layer_num):
        w_lin.append(xavier_uniform(keys[4 * i + 0], (size, size)))
        w_gate.append(xavier_uniform(keys[4 * i + 1], (size, size)))
        b_lin.append(jax.random.uniform(keys[4 * i + 2], (size,), jnp.float32, -bbound, bbound))
        b_gate.append(jax.random.uniform(keys[4 * i + 3], (size,), jnp.float32, -bbound, bbound))
    return (jnp.stack(w_lin), jnp.stack(b_lin), jnp.stack(w_gate), jnp.stack(b_gate))


if __name__ == "__main__":
    layer_num = 2
    size = 64          # channels C
    N, L = 2, 512      # batch, sequence length

    root = jax.random.PRNGKey(0)
    kx1, kx2, kx3, kp1, kp2 = jax.random.split(root, 5)

    w_lin, b_lin, w_gate, b_gate = make_params(kp1, layer_num, size)
    x = jax.random.normal(kx1, (N, size, L), jnp.float32)   # NCL like Conv1d input

    out = jax.block_until_ready(highway_pallas(x, w_lin, b_lin, w_gate, b_gate))
    assert out.shape == (N, size, L)

    # Structural check: same math as the kernel (bf16 MXU operands, f32 accumulation); tolerance
    # covers the EUP approx-reciprocal in the sigmoid.
    ref_bf16 = highway_ref(x, w_lin, b_lin, w_gate, b_gate, mxu_dtype=jnp.bfloat16)
    assert jnp.allclose(out, ref_bf16, atol=2e-2, rtol=2e-2), "mismatch vs bf16-matmul reference"

    # Semantic check vs full-f32 math.
    ref_f32 = highway_ref(x, w_lin, b_lin, w_gate, b_gate, mxu_dtype=jnp.float32)
    assert jnp.allclose(out, ref_f32, atol=5e-2, rtol=5e-2), "mismatch vs f32 reference"

    # Ragged-L path: no wrapper pad/slice, masked tail stores; also exercises the >=2-grid-step
    # guard (N=1, L=200 -> two 128-wide L tiles).
    x2 = jax.random.normal(kx2, (1, size, 200), jnp.float32)
    out2 = jax.block_until_ready(highway_pallas(x2, w_lin, b_lin, w_gate, b_gate))
    assert out2.shape == (1, size, 200)
    ref2 = highway_ref(x2, w_lin, b_lin, w_gate, b_gate, mxu_dtype=jnp.bfloat16)
    assert jnp.allclose(out2, ref2, atol=2e-2, rtol=2e-2), "mismatch on ragged-L path"

    # Deep stack exercises the lax.fori_loop path (n_layers > 4) with dynamic layer indexing.
    deep = 6
    dw_lin, db_lin, dw_gate, db_gate = make_params(kp2, deep, size)
    x3 = jax.random.normal(kx3, (1, size, 256), jnp.float32)
    out3 = jax.block_until_ready(highway_pallas(x3, dw_lin, db_lin, dw_gate, db_gate))
    ref3 = highway_ref(x3, dw_lin, db_lin, dw_gate, db_gate, mxu_dtype=jnp.bfloat16)
    assert jnp.allclose(out3, ref3, atol=2e-2, rtol=2e-2), "mismatch on deep (fori_loop) path"

    print("KERNEL_OK")
</pallas_src>

<mosaic_0001>
module attributes {stable_mosaic.version = 11 : i64} {
  func.func @highway_kernel(%arg0: i32, %arg1: i32, %arg2: memref<1x64x512xf32, #tpu.memory_space<vmem>>, %arg3: memref<2x128x64xbf16, #tpu.memory_space<vmem>>, %arg4: memref<2x128x1xf32, #tpu.memory_space<vmem>>, %arg5: memref<1x64x512xf32, #tpu.memory_space<vmem>>) attributes {dimension_semantics = [#tpu.dimension_semantics<parallel>, #tpu.dimension_semantics<parallel>], iteration_bounds = array<i64: 2, 1>, scalar_prefetch = 0 : i64, scratch_operands = 0 : i64, tpu.core_type = #tpu.core_type<tc>, window_params = [{transform_indices = @transform_0, window_bounds = array<i64: 1, 64, 512>}, {pipeline_mode = #tpu.pipeline_mode<synchronous>, transform_indices = @transform_1, window_bounds = array<i64: 2, 128, 64>}, {pipeline_mode = #tpu.pipeline_mode<synchronous>, transform_indices = @transform_2, window_bounds = array<i64: 2, 128, 1>}, {transform_indices = @transform_3, window_bounds = array<i64: 1, 64, 512>}]} {
    %c0 = arith.constant 0 : index
    %c0_0 = arith.constant 0 : index
    %c0_1 = arith.constant 0 : index
    %0 = vector.load %arg2[%c0, %c0_0, %c0_1] : memref<1x64x512xf32, #tpu.memory_space<vmem>>, vector<1x64x512xf32>
    %1 = vector.shape_cast %0 : vector<1x64x512xf32> to vector<64x512xf32>
    %c0_2 = arith.constant 0 : index
    %c0_3 = arith.constant 0 : index
    %c0_4 = arith.constant 0 : index
    %2 = vector.load %arg3[%c0_2, %c0_3, %c0_4] : memref<2x128x64xbf16, #tpu.memory_space<vmem>>, vector<1x128x64xbf16>
    %3 = vector.shape_cast %2 : vector<1x128x64xbf16> to vector<128x64xbf16>
    %4 = arith.truncf %1 : vector<64x512xf32> to vector<64x512xbf16>
    %cst = arith.constant dense<0.000000e+00> : vector<128x512xf32>
    %5 = tpu.matmul %3, %4, %cst {dimension_numbers = #tpu.dot_dimension_numbers<[1], [0], [0], [1], [0, 0, 1, 1], [], []>} : vector<128x64xbf16>, vector<64x512xbf16>, vector<128x512xf32> -> vector<128x512xf32>
    %c0_5 = arith.constant 0 : index
    %c0_6 = arith.constant 0 : index
    %c0_7 = arith.constant 0 : index
    %6 = vector.load %arg4[%c0_5, %c0_6, %c0_7] : memref<2x128x1xf32, #tpu.memory_space<vmem>>, vector<1x128x1xf32>
    %7 = vector.shape_cast %6 : vector<1x128x1xf32> to vector<128x1xf32>
    %8 = vector.broadcast %7 : vector<128x1xf32> to vector<128x512xf32>
    %9 = arith.addf %5, %8 : vector<128x512xf32>
    %10 = vector.extract_strided_slice %9 {offsets = [0, 0], sizes = [64, 512], strides = [1, 1]} : vector<128x512xf32> to vector<64x512xf32>
    %11 = vector.extract_strided_slice %9 {offsets = [64, 0], sizes = [64, 512], strides = [1, 1]} : vector<128x512xf32> to vector<64x512xf32>
    %cst_8 = arith.constant 0.000000e+00 : f32
    %12 = vector.broadcast %cst_8 : f32 to vector<64x512xf32>
    %13 = arith.subf %12, %10 : vector<64x512xf32>
    %14 = math.exp %13 : vector<64x512xf32>
    %cst_9 = arith.constant 1.000000e+00 : f32
    %15 = vector.broadcast %cst_9 : f32 to vector<64x512xf32>
    %16 = arith.addf %15, %14 : vector<64x512xf32>
    %17 = tpu.reciprocal %16 {approx = true} : vector<64x512xf32> -> vector<64x512xf32>
    %18 = arith.subf %11, %1 : vector<64x512xf32>
    %19 = arith.mulf %17, %18 : vector<64x512xf32>
    %20 = arith.addf %1, %19 : vector<64x512xf32>
    %c1 = arith.constant 1 : index
    %c0_10 = arith.constant 0 : index
    %c0_11 = arith.constant 0 : index
    %21 = vector.load %arg3[%c1, %c0_10, %c0_11] : memref<2x128x64xbf16, #tpu.memory_space<vmem>>, vector<1x128x64xbf16>
    %22 = vector.shape_cast %21 : vector<1x128x64xbf16> to vector<128x64xbf16>
    %23 = arith.truncf %20 : vector<64x512xf32> to vector<64x512xbf16>
    %cst_12 = arith.constant dense<0.000000e+00> : vector<128x512xf32>
    %24 = tpu.matmul %22, %23, %cst_12 {dimension_numbers = #tpu.dot_dimension_numbers<[1], [0], [0], [1], [0, 0, 1, 1], [], []>} : vector<128x64xbf16>, vector<64x512xbf16>, vector<128x512xf32> -> vector<128x512xf32>
    %c1_13 = arith.constant 1 : index
    %c0_14 = arith.constant 0 : index
    %c0_15 = arith.constant 0 : index
    %25 = vector.load %arg4[%c1_13, %c0_14, %c0_15] : memref<2x128x1xf32, #tpu.memory_space<vmem>>, vector<1x128x1xf32>
    %26 = vector.shape_cast %25 : vector<1x128x1xf32> to vector<128x1xf32>
    %27 = vector.broadcast %26 : vector<128x1xf32> to vector<128x512xf32>
    %28 = arith.addf %24, %27 : vector<128x512xf32>
    %29 = vector.extract_strided_slice %28 {offsets = [0, 0], sizes = [64, 512], strides = [1, 1]} : vector<128x512xf32> to vector<64x512xf32>
    %30 = vector.extract_strided_slice %28 {offsets = [64, 0], sizes = [64, 512], strides = [1, 1]} : vector<128x512xf32> to vector<64x512xf32>
    %cst_16 = arith.constant 0.000000e+00 : f32
    %31 = vector.broadcast %cst_16 : f32 to vector<64x512xf32>
    %32 = arith.subf %31, %29 : vector<64x512xf32>
    %33 = math.exp %32 : vector<64x512xf32>
    %cst_17 = arith.constant 1.000000e+00 : f32
    %34 = vector.broadcast %cst_17 : f32 to vector<64x512xf32>
    %35 = arith.addf %34, %33 : vector<64x512xf32>
    %36 = tpu.reciprocal %35 {approx = true} : vector<64x512xf32> -> vector<64x512xf32>
    %37 = arith.subf %30, %20 : vector<64x512xf32>
    %38 = arith.mulf %36, %37 : vector<64x512xf32>
    %39 = arith.addf %20, %38 : vector<64x512xf32>
    %c0_18 = arith.constant 0 : index
    %c0_19 = arith.constant 0 : index
    %c0_20 = arith.constant 0 : index
    %40 = vector.load %arg5[%c0_18, %c0_19, %c0_20] : memref<1x64x512xf32, #tpu.memory_space<vmem>>, vector<1x64x512xf32>
    %41 = vector.shape_cast %40 : vector<1x64x512xf32> to vector<64x512xf32>
    %42 = vector.shape_cast %39 : vector<64x512xf32> to vector<1x64x512xf32>
    tpu.vector_store %arg5[%c0_18, %c0_19, %c0_20], %42 {strides = array<i32>} : memref<1x64x512xf32, #tpu.memory_space<vmem>>, vector<1x64x512xf32>,
    return
  }
  func.func @transform_0(%arg0: i32, %arg1: i32) -> (i32, i32, i32) {
    %c0_i32 = arith.constant 0 : i32
    %c0_i32_0 = arith.constant 0 : i32
    return %arg0, %c0_i32, %arg1 : i32, i32, i32
  }
  func.func @transform_1(%arg0: i32, %arg1: i32) -> (i32, i32, i32) {
    %c0_i32 = arith.constant 0 : i32
    %c0_i32_0 = arith.constant 0 : i32
    %c0_i32_1 = arith.constant 0 : i32
    %c0_i32_2 = arith.constant 0 : i32
    return %c0_i32, %c0_i32_0, %c0_i32_1 : i32, i32, i32
  }
  func.func @transform_2(%arg0: i32, %arg1: i32) -> (i32, i32, i32) {
    %c0_i32 = arith.constant 0 : i32
    %c0_i32_0 = arith.constant 0 : i32
    %c0_i32_1 = arith.constant 0 : i32
    %c0_i32_2 = arith.constant 0 : i32
    return %c0_i32, %c0_i32_0, %c0_i32_1 : i32, i32, i32
  }
  func.func @transform_3(%arg0: i32, %arg1: i32) -> (i32, i32, i32) {
    %c0_i32 = arith.constant 0 : i32
    %c0_i32_0 = arith.constant 0 : i32
    return %arg0, %c0_i32, %arg1 : i32, i32, i32
  }
}

</mosaic_0001>

<llo_original>
// kernel: tpu_custom_call.1
$region0: #{tpu_custom_call.1}
  #allocation0 [shape = 'u32[]', space=smem, size = 0x4, offset = 0x4, fixed_abs, tag = 'smem constant byte address 0x4 - core index']
  #allocation1 [shape = 'u32[144,128]{1,0:T(1,128)}', space=vmem, size = 0x12000, scoped, tag = 'internal scratch']
  %s0 = inlined_call_operand.hbm [shape: f32[2,64,512], index: 0, kind: input, shape index: {}]
  %s1 = inlined_call_operand.vmem [shape: bf16[2,128,64], index: 1, kind: input, shape index: {}]
  %s2 = inlined_call_operand.vmem [shape: f32[2,128,1], index: 2, kind: input, shape index: {}]
  %s3 = inlined_call_operand.hbm [shape: f32[2,64,512], index: 3, kind: output, shape index: {}]
  %s4 = sld [smem:[#allocation0]]
  $region49: #{tpu_custom_call.1} parent=0
    _
  %s6 = ssub.s32 1, %s4
  %s7 = scalar_select 0, %s6, %s4
  $region1: #{tpu_custom_call.1} parent=0
    #allocation2 [shape = 'u8[262144]{0}', space=vmem, size = 0x40000, scoped, tag = 'input window, operand 0']
    #allocation3 [shape = 's32[2]{0}', space=sflag, size = 0x8, scoped, tag = 'scoped memory for tpu_custom_call.1']
    #allocation4 [shape = 's32[2]{0}', space=sflag, size = 0x8, scoped, tag = 'scoped memory for tpu_custom_call.1']
    #allocation5 [shape = 'u8[262144]{0}', space=vmem, size = 0x40000, scoped, tag = 'output window, operand 0']
    %8 = vsyncpa [#allocation3], 0
    %s9 = scalar_lea.sflag [#allocation3], 1
    %10 = vsyncpa %s9, 0
    %11 = vsyncpa [#allocation4], 0
    %s12 = scalar_lea.sflag [#allocation4], 1
    %13 = vsyncpa %s12, 0
    loop: start=0, step=1, limit=4
    $region2: #{tpu_custom_call.1} parent=1 // loop_pre_header
      _
    $region3: #{tpu_custom_call.1} parent=1 // loop_header
      %s15 = sphi 0, %s19
      %p16 = scmp.ge.s32.totalorder %s15, 4
      %s22 = sphi 0, %s34
      %s23 = sphi 0, %s30
      %s24 = sphi 0, %s22
      %s25 = sphi 0, %s23
      %s26 = sphi 0, %s24
      %s27 = sphi 0, %s25
      %s39 = sphi 0, %s41
      %s42 = sphi 0, %s39
      %s43 = sphi 0, %s42
      %s59 = sphi 0, %s43
      %s63 = sphi 0, %s63
      %s65 = sphi 0, %s63
      %s66 = sphi 0, %s65
      %s80 = sphi 0, %s66
      %s84 = sphi 0, %s84
      %s86 = sphi 0, %s84
      %s87 = sphi 0, %s86
      %s101 = sphi 0, %s87
      %s109 = sphi 0, %s111
      %s112 = sphi 0, %s109
      %s113 = sphi 0, %s112
      %s129 = sphi 0, %s113
    $region4: #{tpu_custom_call.1} parent=1 // loop_header_branch
      %18 = sbr.rel (%p16) target = $region8
    $region5: #{tpu_custom_call.1} parent=1 // loop_body
      %s20 = ssub.s32 %s15, 1
      %s21 = ssub.s32 %s15, 2
      %s28 = sadd.s32 1, %s23
      %p29 = scmp.ge.s32.totalorder %s28, 1
      %s30 = scalar_select %p29, 0, %s28
      %s31 = sadd.s32 1, %s22
      %s32 = scalar_select %p29, %s31, %s22
      %p33 = scmp.ge.s32.totalorder %s32, 2
      %s34 = scalar_select %p33, 0, %s32
      %s35 = ssub.s32 %s22, %s34
      %s36 = ssub.s32 %s23, %s30
      %s37 = sor.u32 %s35, %s36
      %p38 = scmp.eq.s32.totalorder %s37, 0
      %s40 = sadd.s32 %s39, 1
      %s41 = scalar_select %p38, %s39, %s40
      %p44 = pneg %p38
      %p45 = scmp.eq.s32.totalorder %s15, 1
      %p46 = por %p44, %p45
      %p47 = scmp.ne.s32.totalorder %s39, %s42
      %p48 = scmp.eq.s32.totalorder %s15, 0
      %p49 = por %p47, %p48
      %p50 = scmp.ne.s32.totalorder %s39, %s42
      %p51 = scmp.eq.s32.totalorder %s20, 1
      %p52 = por %p50, %p51
      %p53 = scmp.ne.s32.totalorder %s42, %s43
      %p54 = scmp.eq.s32.totalorder %s20, 0
      %p55 = por %p53, %p54
      %p56 = scmp.ne.s32.totalorder %s42, %s43
      %p57 = scmp.eq.s32.totalorder %s21, 1
      %p58 = por %p56, %p57
      %p60 = scmp.ne.s32.totalorder %s43, %s59
      %p61 = scmp.eq.s32.totalorder %s21, 0
      %p62 = por %p60, %p61
      %s64 = sadd.s32 %s63, 1
      %p67 = scmp.eq.s32.totalorder %s15, 1
      %p68 = scmp.ne.s32.totalorder %s63, %s65
      %p69 = scmp.eq.s32.totalorder %s15, 0
      %p70 = por %p68, %p69
      %p71 = scmp.ne.s32.totalorder %s63, %s65
      %p72 = scmp.eq.s32.totalorder %s20, 1
      %p73 = por %p71, %p72
      %p74 = scmp.ne.s32.totalorder %s65, %s66
      %p75 = scmp.eq.s32.totalorder %s20, 0
      %p76 = por %p74, %p75
      %p77 = scmp.ne.s32.totalorder %s65, %s66
      %p78 = scmp.eq.s32.totalorder %s21, 1
      %p79 = por %p77, %p78
      %p81 = scmp.ne.s32.totalorder %s66, %s80
      %p82 = scmp.eq.s32.totalorder %s21, 0
      %p83 = por %p81, %p82
      %s85 = sadd.s32 %s84, 1
      %p88 = scmp.eq.s32.totalorder %s15, 1
      %p89 = scmp.ne.s32.totalorder %s84, %s86
      %p90 = scmp.eq.s32.totalorder %s15, 0
      %p91 = por %p89, %p90
      %p92 = scmp.ne.s32.totalorder %s84, %s86
      %p93 = scmp.eq.s32.totalorder %s20, 1
      %p94 = por %p92, %p93
      %p95 = scmp.ne.s32.totalorder %s86, %s87
      %p96 = scmp.eq.s32.totalorder %s20, 0
      %p97 = por %p95, %p96
      %p98 = scmp.ne.s32.totalorder %s86, %s87
      %p99 = scmp.eq.s32.totalorder %s21, 1
      %p100 = por %p98, %p99
      %p102 = scmp.ne.s32.totalorder %s87, %s101
      %p103 = scmp.eq.s32.totalorder %s21, 0
      %p104 = por %p102, %p103
      %s105 = ssub.s32 %s22, %s34
      %s106 = ssub.s32 %s23, %s30
      %s107 = sor.u32 %s105, %s106
      %p108 = scmp.eq.s32.totalorder %s107, 0
      %s110 = sadd.s32 %s109, 1
      %s111 = scalar_select %p108, %s109, %s110
      %p114 = pneg %p108
      %p115 = scmp.eq.s32.totalorder %s15, 1
      %p116 = por %p114, %p115
      %p117 = scmp.ne.s32.totalorder %s109, %s112
      %p118 = scmp.eq.s32.totalorder %s15, 0
      %p119 = por %p117, %p118
      %p120 = scmp.ne.s32.totalorder %s109, %s112
      %p121 = scmp.eq.s32.totalorder %s20, 1
      %p122 = por %p120, %p121
      %p123 = scmp.ne.s32.totalorder %s112, %s113
      %p124 = scmp.eq.s32.totalorder %s20, 0
      %p125 = por %p123, %p124
      %p126 = scmp.ne.s32.totalorder %s112, %s113
      %p127 = scmp.eq.s32.totalorder %s21, 1
      %p128 = por %p126, %p127
      %p130 = scmp.ne.s32.totalorder %s113, %s129
      %p131 = scmp.eq.s32.totalorder %s21, 0
      %p132 = por %p130, %p131
      %p133 = scmp.le.s32.totalorder 1, %s15
      %p134 = scmp.lt.s32.totalorder %s15, 3
      %p135 = pnand %p133, %p134
      %p136 = pneg %p135
      // Predicated region
      $region9: #{tpu_custom_call.1} parent=5 // pred_check
        _
      $region10: #{tpu_custom_call.1} parent=5 // pred_check_branch
        %138 = sbr.rel (%p135) target = $region12
      $region11: #{tpu_custom_call.1} parent=5 // pred_region
        %s139 = ssub.s32 %s15, 1
        // Predicated region
        $region13: #{tpu_custom_call.1} parent=11 // pred_check
          %p140 = pneg %p76
        $region14: #{tpu_custom_call.1} parent=11 // pred_check_branch
          %142 = sbr.rel (%p140) target = $region16
        $region15: #{tpu_custom_call.1} parent=11 // pred_region
          _
        $region16: #{tpu_custom_call.1} parent=11 // pred_fallthru
          _
        // Predicated region
        $region17: #{tpu_custom_call.1} parent=11 // pred_check
          %p143 = pneg %p97
        $region18: #{tpu_custom_call.1} parent=11 // pred_check_branch
          %145 = sbr.rel (%p143) target = $region20
        $region19: #{tpu_custom_call.1} parent=11 // pred_region
          _
        $region20: #{tpu_custom_call.1} parent=11 // pred_fallthru
          _
      $region12: #{tpu_custom_call.1} parent=5 // pred_fallthru
        _
      %p146 = scmp.lt.s32.totalorder %s15, 2
      // Predicated region
      $region21: #{tpu_custom_call.1} parent=5 // pred_check
        %p147 = pneg %p146
      $region22: #{tpu_custom_call.1} parent=5 // pred_check_branch
        %149 = sbr.rel (%p147) target = $region24
      $region23: #{tpu_custom_call.1} parent=5 // pred_region
        // Predicated region
        $region25: #{tpu_custom_call.1} parent=23 // pred_check
          %p150 = pneg %p49
        $region26: #{tpu_custom_call.1} parent=23 // pred_check_branch
          %152 = sbr.rel (%p150) target = $region28
        $region27: #{tpu_custom_call.1} parent=23 // pred_region
          %s153 = sand.u32 %s39, 1
          %s154 = scalar_lea.sflag [#allocation3], %s153
          %s155 = sand.u32 %s39, 1
          %s156 = smul.addr %s155, 256
          %s157 = scalar_lea.vmem [#allocation2], %s156
          %s158 = smul.u32 4, %s23
          %s160 = ssub.s32 4096, 4096
          %161 = vsyncadd %s154, %s160
          %s162 = smul.addr %s22, 32
          %s163 = sadd.s32 %s158, %s162
          %s164 = smul.addr %s163, 128
          %s165 = scalar_lea.hbm %s0, %s164
          %s166 = sshll.u32 %s157, 4
          %s167 = int_to_ptr.vmem [resolvable:$true] %s166
          %172 = dma.hbm_to_vmem [thread:$0]  %s165, 4096, %s167, %s154, 512, 512, 32
        $region28: #{tpu_custom_call.1} parent=23 // pred_fallthru
          _
      $region24: #{tpu_custom_call.1} parent=5 // pred_fallthru
        _
      %p173 = scmp.le.s32.totalorder 1, %s15
      %p174 = scmp.lt.s32.totalorder %s15, 3
      %p175 = pnand %p173, %p174
      %p176 = pneg %p175
      // Predicated region
      $region29: #{tpu_custom_call.1} parent=5 // pred_check
        _
      $region30: #{tpu_custom_call.1} parent=5 // pred_check_branch
        %178 = sbr.rel (%p175) target = $region32
      $region31: #{tpu_custom_call.1} parent=5 // pred_region
        %s179 = ssub.s32 %s15, 1
        %s180 = sand.u32 %s42, 1
        %s181 = scalar_lea.sflag [#allocation3], %s180
        %s182 = sand.u32 %s42, 1
        %s183 = smul.addr %s182, 256
        %s184 = scalar_lea.vmem [#allocation2], %s183
        // Predicated region
        $region33: #{tpu_custom_call.1} parent=31 // pred_check
          %p185 = pneg %p55
        $region34: #{tpu_custom_call.1} parent=31 // pred_check_branch
          %187 = sbr.rel (%p185) target = $region36
        $region35: #{tpu_custom_call.1} parent=31 // pred_region
          %188 = dma.done %s181, 4096
        $region36: #{tpu_custom_call.1} parent=31 // pred_fallthru
          _
        %s189 = sand.u32 %s42, 1
        %s190 = scalar_lea.sflag [#allocation3], %s189
        %s191 = sand.u32 %s42, 1
        %s192 = smul.addr %s191, 256
        %s193 = scalar_lea.vmem [#allocation2], %s192
        %p194 = pneg %p55
        %p195 = pneg %p52
        %p196 = pneg %p76
        %p197 = pneg %p73
        %p198 = pneg %p97
        %p199 = pneg %p94
        %p200 = pneg %p125
        %p201 = pneg %p122
        %s202 = sand.u32 %s112, 1
        %s203 = scalar_lea.sflag [#allocation4], %s202
        %s204 = sand.u32 %s112, 1
        %s205 = smul.addr %s204, 256
        %s206 = scalar_lea.vmem [#allocation5], %s205
        %s207 = smul.u32 4, %s25
        %s208 = smul.u32 4, %s25
        %v210 = vld [vmem:[%s184] sm:$0xff]
        %v211 = vld [vmem:[%s184 + $0x8] sm:$0xff]
        %v212 = vld [vmem:[%s184 + $0x10] sm:$0xff]
        %v213 = vld [vmem:[%s184 + $0x18] sm:$0xff]
        %v214 = vld [vmem:[%s184 + $0x20] sm:$0xff]
        %v215 = vld [vmem:[%s184 + $0x28] sm:$0xff]
        %v216 = vld [vmem:[%s184 + $0x30] sm:$0xff]
        %v217 = vld [vmem:[%s184 + $0x38] sm:$0xff]
        %v218 = vld [vmem:[%s184 + $0x40] sm:$0xff]
        %v219 = vld [vmem:[%s184 + $0x48] sm:$0xff]
        %v220 = vld [vmem:[%s184 + $0x50] sm:$0xff]
        %v221 = vld [vmem:[%s184 + $0x58] sm:$0xff]
        %v222 = vld [vmem:[%s184 + $0x60] sm:$0xff]
        %v223 = vld [vmem:[%s184 + $0x68] sm:$0xff]
        %v224 = vld [vmem:[%s184 + $0x70] sm:$0xff]
        %v225 = vld [vmem:[%s184 + $0x78] sm:$0xff]
        %v226 = vld [vmem:[%s184 + $0x80] sm:$0xff]
        %v227 = vld [vmem:[%s184 + $0x88] sm:$0xff]
        %v228 = vld [vmem:[%s184 + $0x90] sm:$0xff]
        %v229 = vld [vmem:[%s184 + $0x98] sm:$0xff]
        %v230 = vld [vmem:[%s184 + $0xa0] sm:$0xff]
        %v231 = vld [vmem:[%s184 + $0xa8] sm:$0xff]
        %v232 = vld [vmem:[%s184 + $0xb0] sm:$0xff]
        %v233 = vld [vmem:[%s184 + $0xb8] sm:$0xff]
        %v234 = vld [vmem:[%s184 + $0xc0] sm:$0xff]
        %v235 = vld [vmem:[%s184 + $0xc8] sm:$0xff]
        %v236 = vld [vmem:[%s184 + $0xd0] sm:$0xff]
        %v237 = vld [vmem:[%s184 + $0xd8] sm:$0xff]
        %v238 = vld [vmem:[%s184 + $0xe0] sm:$0xff]
        %v239 = vld [vmem:[%s184 + $0xe8] sm:$0xff]
        %v240 = vld [vmem:[%s184 + $0xf0] sm:$0xff]
        %v241 = vld [vmem:[%s184 + $0xf8] sm:$0xff]
        %v242 = vld [vmem:[%s1] sm:$0xf]
        %v243 = vld [vmem:[%s1 + $0x4] sm:$0xf]
        %v244 = vld [vmem:[%s1 + $0x8] sm:$0xf]
        %v245 = vld [vmem:[%s1 + $0xc] sm:$0xf]
        %v246 = vld [vmem:[%s1 + $0x10] sm:$0xf]
        %v247 = vld [vmem:[%s1 + $0x14] sm:$0xf]
        %v248 = vld [vmem:[%s1 + $0x18] sm:$0xf]
        %v249 = vld [vmem:[%s1 + $0x1c] sm:$0xf]
        %v250 = vld [vmem:[%s1 + $0x20] sm:$0xf]
        %v251 = vld [vmem:[%s1 + $0x24] sm:$0xf]
        %v252 = vld [vmem:[%s1 + $0x28] sm:$0xf]
        %v253 = vld [vmem:[%s1 + $0x2c] sm:$0xf]
        %v254 = vld [vmem:[%s1 + $0x30] sm:$0xf]
        %v255 = vld [vmem:[%s1 + $0x34] sm:$0xf]
        %v256 = vld [vmem:[%s1 + $0x38] sm:$0xf]
        %v257 = vld [vmem:[%s1 + $0x3c] sm:$0xf]
        %v258 = vpack.c.bf16 %v214, %v210
        %v259 = vpack.c.bf16 %v215, %v211
        %v260 = vpack.c.bf16 %v216, %v212
        %v261 = vpack.c.bf16 %v217, %v213
        %v262 = vpack.c.bf16 %v222, %v218
        %v263 = vpack.c.bf16 %v223, %v219
        %v264 = vpack.c.bf16 %v224, %v220
        %v265 = vpack.c.bf16 %v225, %v221
        %v266 = vpack.c.bf16 %v230, %v226
        %v267 = vpack.c.bf16 %v231, %v227
        %v268 = vpack.c.bf16 %v232, %v228
        %v269 = vpack.c.bf16 %v233, %v229
        %v270 = vpack.c.bf16 %v238, %v234
        %v271 = vpack.c.bf16 %v239, %v235
        %v272 = vpack.c.bf16 %v240, %v236
        %v273 = vpack.c.bf16 %v241, %v237
        %v274 = vld [vmem:[%s2] sm:$0xff]
        %v275 = vld [vmem:[%s2 + $0x8] sm:$0xff]
        %v276 = vld [vmem:[%s2 + $0x10] sm:$0xff]
        %v277 = vld [vmem:[%s2 + $0x18] sm:$0xff]
        %v278 = vld [vmem:[%s2 + $0x20] sm:$0xff]
        %v279 = vld [vmem:[%s2 + $0x28] sm:$0xff]
        %v280 = vld [vmem:[%s2 + $0x30] sm:$0xff]
        %v281 = vld [vmem:[%s2 + $0x38] sm:$0xff]
        %v282 = vld [vmem:[%s2 + $0x40] sm:$0xff]
        %v283 = vld [vmem:[%s2 + $0x48] sm:$0xff]
        %v284 = vld [vmem:[%s2 + $0x50] sm:$0xff]
        %v285 = vld [vmem:[%s2 + $0x58] sm:$0xff]
        %v286 = vld [vmem:[%s2 + $0x60] sm:$0xff]
        %v287 = vld [vmem:[%s2 + $0x68] sm:$0xff]
        %v288 = vld [vmem:[%s2 + $0x70] sm:$0xff]
        %v289 = vld [vmem:[%s2 + $0x78] sm:$0xff]
        %291 = vset.pattern.permute.xlu0 0
        %292 = vperm.xlu0 %291, %v274
        %v293 = vpop.permute.xlu0 %292
        %296 = vset.pattern.permute.xlu0 0
        %297 = vperm.xlu0 %296, %v275
        %v298 = vpop.permute.xlu0 %297
        %301 = vset.pattern.permute.xlu0 0
        %302 = vperm.xlu0 %301, %v276
        %v303 = vpop.permute.xlu0 %302
        %306 = vset.pattern.permute.xlu0 0
        %307 = vperm.xlu0 %306, %v277
        %v308 = vpop.permute.xlu0 %307
        %311 = vset.pattern.permute.xlu0 0
        %312 = vperm.xlu0 %311, %v278
        %v313 = vpop.permute.xlu0 %312
        %316 = vset.pattern.permute.xlu0 0
        %317 = vperm.xlu0 %316, %v279
        %v318 = vpop.permute.xlu0 %317
        %321 = vset.pattern.permute.xlu0 0
        %322 = vperm.xlu0 %321, %v280
        %v323 = vpop.permute.xlu0 %322
        %326 = vset.pattern.permute.xlu0 0
        %327 = vperm.xlu0 %326, %v281
        %v328 = vpop.permute.xlu0 %327
        %331 = vset.pattern.permute.xlu0 0
        %332 = vperm.xlu0 %331, %v282
        %v333 = vpop.permute.xlu0 %332
        %336 = vset.pattern.permute.xlu0 0
        %337 = vperm.xlu0 %336, %v283
        %v338 = vpop.permute.xlu0 %337
        %341 = vset.pattern.permute.xlu0 0
        %342 = vperm.xlu0 %341, %v284
        %v343 = vpop.permute.xlu0 %342
        %346 = vset.pattern.permute.xlu0 0
        %347 = vperm.xlu0 %346, %v285
        %v348 = vpop.permute.xlu0 %347
        %351 = vset.pattern.permute.xlu0 0
        %352 = vperm.xlu0 %351, %v286
        %v353 = vpop.permute.xlu0 %352
        %356 = vset.pattern.permute.xlu0 0
        %357 = vperm.xlu0 %356, %v287
        %v358 = vpop.permute.xlu0 %357
        %361 = vset.pattern.permute.xlu0 0
        %362 = vperm.xlu0 %361, %v288
        %v363 = vpop.permute.xlu0 %362
        %366 = vset.pattern.permute.xlu0 0
        %367 = vperm.xlu0 %366, %v289
        %v368 = vpop.permute.xlu0 %367
        %v386 = vunpack.c.l.b16 %v242
        %v387 = vunpack.c.l.b16 %v243
        %v388 = vunpack.c.l.b16 %v244
        %v389 = vunpack.c.l.b16 %v245
        %v390 = vunpack.c.l.b16 %v246
        %v391 = vunpack.c.l.b16 %v247
        %v392 = vunpack.c.l.b16 %v248
        %v393 = vunpack.c.l.b16 %v249
        %v394 = vunpack.c.l.b16 %v250
        %v395 = vunpack.c.l.b16 %v251
        %v396 = vunpack.c.l.b16 %v252
        %v397 = vunpack.c.l.b16 %v253
        %v398 = vunpack.c.l.b16 %v254
        %v399 = vunpack.c.l.b16 %v255
        %v400 = vunpack.c.l.b16 %v256
        %v401 = vunpack.c.l.b16 %v257
        %v402 = vpack.c.b16 %v387, %v386
        %v403 = vpack.c.b16 %v389, %v388
        %v404 = vpack.c.b16 %v391, %v390
        %v405 = vpack.c.b16 %v393, %v392
        %v406 = vpack.c.b16 %v395, %v394
        %v407 = vpack.c.b16 %v397, %v396
        %v408 = vpack.c.b16 %v399, %v398
        %v409 = vpack.c.b16 %v401, %v400
        %vm410 = vcmask 523264
        %v412 = vsel %vm410, %v402, 0
        %v415 = vsel %vm410, %v403, 0
        %v418 = vsel %vm410, %v404, 0
        %v421 = vsel %vm410, %v405, 0
        %v424 = vsel %vm410, %v406, 0
        %v427 = vsel %vm410, %v407, 0
        %v430 = vsel %vm410, %v408, 0
        %v433 = vsel %vm410, %v409, 0
        %435 = vmatprep.subr.bf16.mxu0 %v259
        %436 = vmatpush1.bf16.msra.mxu0 %v258
        %437 = vmatprep.subr.bf16.mxu0 %v263
        %438 = vmatpush1.bf16.msra.mxu0 %v262
        %439 = vmatprep.subr.bf16.mxu0 %v267
        %440 = vmatpush1.bf16.msra.mxu0 %v266
        %441 = vmatprep.subr.bf16.mxu0 %v271
        %442 = vmatpush1.bf16.msra.mxu0 %v270
        %443 = vmatprep.subr.bf16.mxu0 0
        %444 = vmatpush1.bf16.msra.mxu0 0
        %445 = vmatprep.subr.bf16.mxu0 0
        %446 = vmatpush1.bf16.msra.mxu0 0
        %447 = vmatprep.subr.bf16.mxu0 0
        %448 = vmatpush1.bf16.msra.mxu0 0
        %449 = vmatprep.subr.bf16.mxu0 0
        %450 = vmatpush1.bf16.msra.mxu0 0
        %451 = vmatprep.subr.bf16.mxu0 0
        %452 = vmatpush1.bf16.msra.mxu0 0
        %453 = vmatprep.subr.bf16.mxu0 0
        %454 = vmatpush1.bf16.msra.mxu0 0
        %455 = vmatprep.subr.bf16.mxu0 0
        %456 = vmatpush1.bf16.msra.mxu0 0
        %457 = vmatprep.subr.bf16.mxu0 0
        %458 = vmatpush1.bf16.msra.mxu0 0
        %459 = vmatprep.subr.bf16.mxu0 0
        %460 = vmatpush1.bf16.msra.mxu0 0
        %461 = vmatprep.subr.bf16.mxu0 0
        %462 = vmatpush1.bf16.msra.mxu0 0
        %463 = vmatprep.subr.bf16.mxu0 0
        %464 = vmatpush1.bf16.msra.mxu0 0
        %465 = vmatprep.subr.bf16.mxu0 0
        %466 = vmatpush1.bf16.msra.mxu0 0
        %467 = vmatprep.mubr.bf16.mxu0 0
        %468 = vmatmul.mubr.bf16.gmra.mrb[0].mxu0 %v412
        %v469 = vpop.f32.mrb[0].mxu0
        %v470 = vadd.f32 %v293, %v469
        %v471 = vpop.f32.mrb[0].mxu0
        %v472 = vadd.f32 %v293, %v471
        %v473 = vpop.f32.mrb[0].mxu0
        %v474 = vadd.f32 %v298, %v473
        %v475 = vpop.f32.mrb[0].mxu0
        %v476 = vadd.f32 %v298, %v475
        %477 = vmatprep.mubr.bf16.mxu0 0
        %478 = vmatmul.mubr.bf16.gmra.mrb[0].mxu0 %v415
        %v479 = vpop.f32.mrb[0].mxu0
        %v480 = vadd.f32 %v303, %v479
        %v481 = vpop.f32.mrb[0].mxu0
        %v482 = vadd.f32 %v303, %v481
        %v483 = vpop.f32.mrb[0].mxu0
        %v484 = vadd.f32 %v308, %v483
        %v485 = vpop.f32.mrb[0].mxu0
        %v486 = vadd.f32 %v308, %v485
        %487 = vmatprep.mubr.bf16.mxu0 0
        %488 = vmatmul.mubr.bf16.gmra.mrb[0].mxu0 %v418
        %v489 = vpop.f32.mrb[0].mxu0
        %v490 = vadd.f32 %v313, %v489
        %v491 = vpop.f32.mrb[0].mxu0
        %v492 = vadd.f32 %v313, %v491
        %v493 = vpop.f32.mrb[0].mxu0
        %v494 = vadd.f32 %v318, %v493
        %v495 = vpop.f32.mrb[0].mxu0
        %v496 = vadd.f32 %v318, %v495
        %497 = vmatprep.mubr.bf16.mxu0 0
        %498 = vmatmul.mubr.bf16.gmra.mrb[0].mxu0 %v421
        %v499 = vpop.f32.mrb[0].mxu0
        %v500 = vadd.f32 %v323, %v499
        %v501 = vpop.f32.mrb[0].mxu0
        %v502 = vadd.f32 %v323, %v501
        %v503 = vpop.f32.mrb[0].mxu0
        %v504 = vadd.f32 %v328, %v503
        %v505 = vpop.f32.mrb[0].mxu0
        %v506 = vadd.f32 %v328, %v505
        %507 = vmatprep.mubr.bf16.mxu0 0
        %508 = vmatmul.mubr.bf16.gmra.mrb[0].mxu0 %v424
        %v509 = vpop.f32.mrb[0].mxu0
        %v510 = vadd.f32 %v333, %v509
        %v511 = vpop.f32.mrb[0].mxu0
        %v512 = vadd.f32 %v333, %v511
        %v513 = vpop.f32.mrb[0].mxu0
        %v514 = vadd.f32 %v338, %v513
        %v515 = vpop.f32.mrb[0].mxu0
        %v516 = vadd.f32 %v338, %v515
        %517 = vmatprep.mubr.bf16.mxu0 0
        %518 = vmatmul.mubr.bf16.gmra.mrb[0].mxu0 %v427
        %v519 = vpop.f32.mrb[0].mxu0
        %v520 = vadd.f32 %v343, %v519
        %v521 = vpop.f32.mrb[0].mxu0
        %v522 = vadd.f32 %v343, %v521
        %v523 = vpop.f32.mrb[0].mxu0
        %v524 = vadd.f32 %v348, %v523
        %v525 = vpop.f32.mrb[0].mxu0
        %v526 = vadd.f32 %v348, %v525
        %527 = vmatprep.mubr.bf16.mxu0 0
        %528 = vmatmul.mubr.bf16.gmra.mrb[0].mxu0 %v430
        %v529 = vpop.f32.mrb[0].mxu0
        %v530 = vadd.f32 %v353, %v529
        %v531 = vpop.f32.mrb[0].mxu0
        %v532 = vadd.f32 %v353, %v531
        %v533 = vpop.f32.mrb[0].mxu0
        %v534 = vadd.f32 %v358, %v533
        %v535 = vpop.f32.mrb[0].mxu0
        %v536 = vadd.f32 %v358, %v535
        %537 = vmatprep.mubr.bf16.mxu0 0
        %538 = vmatmul.mubr.bf16.gmra.mrb[0].mxu0 %v433
        %v539 = vpop.f32.mrb[0].mxu0
        %v540 = vadd.f32 %v363, %v539
        %v541 = vpop.f32.mrb[0].mxu0
        %v542 = vadd.f32 %v363, %v541
        %v543 = vpop.f32.mrb[0].mxu0
        %v544 = vadd.f32 %v368, %v543
        %v545 = vpop.f32.mrb[0].mxu0
        %v546 = vadd.f32 %v368, %v545
        %547 = vdwg.mxu0
        %548 = vmatprep.subr.bf16.mxu0 %v261
        %549 = vmatpush1.bf16.msra.mxu0 %v260
        %550 = vmatprep.subr.bf16.mxu0 %v265
        %551 = vmatpush1.bf16.msra.mxu0 %v264
        %552 = vmatprep.subr.bf16.mxu0 %v269
        %553 = vmatpush1.bf16.msra.mxu0 %v268
        %554 = vmatprep.subr.bf16.mxu0 %v273
        %555 = vmatpush1.bf16.msra.mxu0 %v272
        %556 = vmatprep.subr.bf16.mxu0 0
        %557 = vmatpush1.bf16.msra.mxu0 0
        %558 = vmatprep.subr.bf16.mxu0 0
        %559 = vmatpush1.bf16.msra.mxu0 0
        %560 = vmatprep.subr.bf16.mxu0 0
        %561 = vmatpush1.bf16.msra.mxu0 0
        %562 = vmatprep.subr.bf16.mxu0 0
        %563 = vmatpush1.bf16.msra.mxu0 0
        %564 = vmatprep.subr.bf16.mxu0 0
        %565 = vmatpush1.bf16.msra.mxu0 0
        %566 = vmatprep.subr.bf16.mxu0 0
        %567 = vmatpush1.bf16.msra.mxu0 0
        %568 = vmatprep.subr.bf16.mxu0 0
        %569 = vmatpush1.bf16.msra.mxu0 0
        %570 = vmatprep.subr.bf16.mxu0 0
        %571 = vmatpush1.bf16.msra.mxu0 0
        %572 = vmatprep.subr.bf16.mxu0 0
        %573 = vmatpush1.bf16.msra.mxu0 0
        %574 = vmatprep.subr.bf16.mxu0 0
        %575 = vmatpush1.bf16.msra.mxu0 0
        %576 = vmatprep.subr.bf16.mxu0 0
        %577 = vmatpush1.bf16.msra.mxu0 0
        %578 = vmatprep.subr.bf16.mxu0 0
        %579 = vmatpush1.bf16.msra.mxu0 0
        %580 = vmatprep.mubr.bf16.mxu0 0
        %581 = vmatmul.mubr.bf16.gmra.mrb[0].mxu0 %v412
        %v582 = vpop.f32.mrb[0].mxu0
        %v583 = vadd.f32 %v293, %v582
        %v584 = vpop.f32.mrb[0].mxu0
        %v585 = vadd.f32 %v293, %v584
        %v586 = vpop.f32.mrb[0].mxu0
        %v587 = vadd.f32 %v298, %v586
        %v588 = vpop.f32.mrb[0].mxu0
        %v589 = vadd.f32 %v298, %v588
        %590 = vmatprep.mubr.bf16.mxu0 0
        %591 = vmatmul.mubr.bf16.gmra.mrb[0].mxu0 %v415
        %v592 = vpop.f32.mrb[0].mxu0
        %v593 = vadd.f32 %v303, %v592
        %v594 = vpop.f32.mrb[0].mxu0
        %v595 = vadd.f32 %v303, %v594
        %v596 = vpop.f32.mrb[0].mxu0
        %v597 = vadd.f32 %v308, %v596
        %v598 = vpop.f32.mrb[0].mxu0
        %v599 = vadd.f32 %v308, %v598
        %600 = vmatprep.mubr.bf16.mxu0 0
        %601 = vmatmul.mubr.bf16.gmra.mrb[0].mxu0 %v418
        %v602 = vpop.f32.mrb[0].mxu0
        %v603 = vadd.f32 %v313, %v602
        %v604 = vpop.f32.mrb[0].mxu0
        %v605 = vadd.f32 %v313, %v604
        %v606 = vpop.f32.mrb[0].mxu0
        %v607 = vadd.f32 %v318, %v606
        %v608 = vpop.f32.mrb[0].mxu0
        %v609 = vadd.f32 %v318, %v608
        %610 = vmatprep.mubr.bf16.mxu0 0
        %611 = vmatmul.mubr.bf16.gmra.mrb[0].mxu0 %v421
        %v612 = vpop.f32.mrb[0].mxu0
        %v613 = vadd.f32 %v323, %v612
        %v614 = vpop.f32.mrb[0].mxu0
        %v615 = vadd.f32 %v323, %v614
        %v616 = vpop.f32.mrb[0].mxu0
        %v617 = vadd.f32 %v328, %v616
        %v618 = vpop.f32.mrb[0].mxu0
        %v619 = vadd.f32 %v328, %v618
        %620 = vmatprep.mubr.bf16.mxu0 0
        %621 = vmatmul.mubr.bf16.gmra.mrb[0].mxu0 %v424
        %v622 = vpop.f32.mrb[0].mxu0
        %v623 = vadd.f32 %v333, %v622
        %v624 = vpop.f32.mrb[0].mxu0
        %v625 = vadd.f32 %v333, %v624
        %v626 = vpop.f32.mrb[0].mxu0
        %v627 = vadd.f32 %v338, %v626
        %v628 = vpop.f32.mrb[0].mxu0
        %v629 = vadd.f32 %v338, %v628
        %630 = vmatprep.mubr.bf16.mxu0 0
        %631 = vmatmul.mubr.bf16.gmra.mrb[0].mxu0 %v427
        %v632 = vpop.f32.mrb[0].mxu0
        %v633 = vadd.f32 %v343, %v632
        %v634 = vpop.f32.mrb[0].mxu0
        %v635 = vadd.f32 %v343, %v634
        %v636 = vpop.f32.mrb[0].mxu0
        %v637 = vadd.f32 %v348, %v636
        %v638 = vpop.f32.mrb[0].mxu0
        %v639 = vadd.f32 %v348, %v638
        %640 = vmatprep.mubr.bf16.mxu0 0
        %641 = vmatmul.mubr.bf16.gmra.mrb[0].mxu0 %v430
        %v642 = vpop.f32.mrb[0].mxu0
        %v643 = vadd.f32 %v353, %v642
        %v644 = vpop.f32.mrb[0].mxu0
        %v645 = vadd.f32 %v353, %v644
        %v646 = vpop.f32.mrb[0].mxu0
        %v647 = vadd.f32 %v358, %v646
        %v648 = vpop.f32.mrb[0].mxu0
        %v649 = vadd.f32 %v358, %v648
        %650 = vmatprep.mubr.bf16.mxu0 0
        %651 = vmatmul.mubr.bf16.gmra.mrb[0].mxu0 %v433
        %v652 = vpop.f32.mrb[0].mxu0
        %v653 = vadd.f32 %v363, %v652
        %v654 = vpop.f32.mrb[0].mxu0
        %v655 = vadd.f32 %v363, %v654
        %v656 = vpop.f32.mrb[0].mxu0
        %v657 = vadd.f32 %v368, %v656
        %v658 = vpop.f32.mrb[0].mxu0
        %v659 = vadd.f32 %v368, %v658
        %660 = vdwg.mxu0
        %v661 = vsub.f32 0.0, %v470
        %v662 = vsub.f32 0.0, %v472
        %v663 = vsub.f32 0.0, %v583
        %v664 = vsub.f32 0.0, %v585
        %v665 = vsub.f32 0.0, %v474
        %v666 = vsub.f32 0.0, %v476
        %v667 = vsub.f32 0.0, %v587
        %v668 = vsub.f32 0.0, %v589
        %v669 = vsub.f32 0.0, %v480
        %v670 = vsub.f32 0.0, %v482
        %v671 = vsub.f32 0.0, %v593
        %v672 = vsub.f32 0.0, %v595
        %v673 = vsub.f32 0.0, %v484
        %v674 = vsub.f32 0.0, %v486
        %v675 = vsub.f32 0.0, %v597
        %v676 = vsub.f32 0.0, %v599
        %v677 = vsub.f32 0.0, %v490
        %v678 = vsub.f32 0.0, %v492
        %v679 = vsub.f32 0.0, %v603
        %v680 = vsub.f32 0.0, %v605
        %v681 = vsub.f32 0.0, %v494
        %v682 = vsub.f32 0.0, %v496
        %v683 = vsub.f32 0.0, %v607
        %v684 = vsub.f32 0.0, %v609
        %v685 = vsub.f32 0.0, %v500
        %v686 = vsub.f32 0.0, %v502
        %v687 = vsub.f32 0.0, %v613
        %v688 = vsub.f32 0.0, %v615
        %v689 = vsub.f32 0.0, %v504
        %v690 = vsub.f32 0.0, %v506
        %v691 = vsub.f32 0.0, %v617
        %v692 = vsub.f32 0.0, %v619
        %v693 = vmul.f32 %v661, 1.442695
        %v694 = vpow.pop %v693
        %v695 = vmul.f32 %v662, 1.442695
        %v696 = vpow.pop %v695
        %v697 = vmul.f32 %v663, 1.442695
        %v698 = vpow.pop %v697
        %v699 = vmul.f32 %v664, 1.442695
        %v700 = vpow.pop %v699
        %v701 = vmul.f32 %v665, 1.442695
        %v702 = vpow.pop %v701
        %v703 = vmul.f32 %v666, 1.442695
        %v704 = vpow.pop %v703
        %v705 = vmul.f32 %v667, 1.442695
        %v706 = vpow.pop %v705
        %v707 = vmul.f32 %v668, 1.442695
        %v708 = vpow.pop %v707
        %v709 = vmul.f32 %v669, 1.442695
        %v710 = vpow.pop %v709
        %v711 = vmul.f32 %v670, 1.442695
        %v712 = vpow.pop %v711
        %v713 = vmul.f32 %v671, 1.442695
        %v714 = vpow.pop %v713
        %v715 = vmul.f32 %v672, 1.442695
        %v716 = vpow.pop %v715
        %v717 = vmul.f32 %v673, 1.442695
        %v718 = vpow.pop %v717
        %v719 = vmul.f32 %v674, 1.442695
        %v720 = vpow.pop %v719
        %v721 = vmul.f32 %v675, 1.442695
        %v722 = vpow.pop %v721
        %v723 = vmul.f32 %v676, 1.442695
        %v724 = vpow.pop %v723
        %v725 = vmul.f32 %v677, 1.442695
        %v726 = vpow.pop %v725
        %v727 = vmul.f32 %v678, 1.442695
        %v728 = vpow.pop %v727
        %v729 = vmul.f32 %v679, 1.442695
        %v730 = vpow.pop %v729
        %v731 = vmul.f32 %v680, 1.442695
        %v732 = vpow.pop %v731
        %v733 = vmul.f32 %v681, 1.442695
        %v734 = vpow.pop %v733
        %v735 = vmul.f32 %v682, 1.442695
        %v736 = vpow.pop %v735
        %v737 = vmul.f32 %v683, 1.442695
        %v738 = vpow.pop %v737
        %v739 = vmul.f32 %v684, 1.442695
        %v740 = vpow.pop %v739
        %v741 = vmul.f32 %v685, 1.442695
        %v742 = vpow.pop %v741
        %v743 = vmul.f32 %v686, 1.442695
        %v744 = vpow.pop %v743
        %v745 = vmul.f32 %v687, 1.442695
        %v746 = vpow.pop %v745
        %v747 = vmul.f32 %v688, 1.442695
        %v748 = vpow.pop %v747
        %v749 = vmul.f32 %v689, 1.442695
        %v750 = vpow.pop %v749
        %v751 = vmul.f32 %v690, 1.442695
        %v752 = vpow.pop %v751
        %v753 = vmul.f32 %v691, 1.442695
        %v754 = vpow.pop %v753
        %v755 = vmul.f32 %v692, 1.442695
        %v756 = vpow.pop %v755
        %v757 = vadd.f32 %v694, 1.0
        %v758 = vadd.f32 %v696, 1.0
        %v759 = vadd.f32 %v698, 1.0
        %v760 = vadd.f32 %v700, 1.0
        %v761 = vadd.f32 %v702, 1.0
        %v762 = vadd.f32 %v704, 1.0
        %v763 = vadd.f32 %v706, 1.0
        %v764 = vadd.f32 %v708, 1.0
        %v765 = vadd.f32 %v710, 1.0
        %v766 = vadd.f32 %v712, 1.0
        %v767 = vadd.f32 %v714, 1.0
        %v768 = vadd.f32 %v716, 1.0
        %v769 = vadd.f32 %v718, 1.0
        %v770 = vadd.f32 %v720, 1.0
        %v771 = vadd.f32 %v722, 1.0
        %v772 = vadd.f32 %v724, 1.0
        %v773 = vadd.f32 %v726, 1.0
        %v774 = vadd.f32 %v728, 1.0
        %v775 = vadd.f32 %v730, 1.0
        %v776 = vadd.f32 %v732, 1.0
        %v777 = vadd.f32 %v734, 1.0
        %v778 = vadd.f32 %v736, 1.0
        %v779 = vadd.f32 %v738, 1.0
        %v780 = vadd.f32 %v740, 1.0
        %v781 = vadd.f32 %v742, 1.0
        %v782 = vadd.f32 %v744, 1.0
        %v783 = vadd.f32 %v746, 1.0
        %v784 = vadd.f32 %v748, 1.0
        %v785 = vadd.f32 %v750, 1.0
        %v786 = vadd.f32 %v752, 1.0
        %v787 = vadd.f32 %v754, 1.0
        %v788 = vadd.f32 %v756, 1.0
        %v789 = vrcp.pop %v757
        %v790 = vrcp.pop %v758
        %v791 = vrcp.pop %v759
        %v792 = vrcp.pop %v760
        %v793 = vrcp.pop %v761
        %v794 = vrcp.pop %v762
        %v795 = vrcp.pop %v763
        %v796 = vrcp.pop %v764
        %v797 = vrcp.pop %v765
        %v798 = vrcp.pop %v766
        %v799 = vrcp.pop %v767
        %v800 = vrcp.pop %v768
        %v801 = vrcp.pop %v769
        %v802 = vrcp.pop %v770
        %v803 = vrcp.pop %v771
        %v804 = vrcp.pop %v772
        %v805 = vrcp.pop %v773
        %v806 = vrcp.pop %v774
        %v807 = vrcp.pop %v775
        %v808 = vrcp.pop %v776
        %v809 = vrcp.pop %v777
        %v810 = vrcp.pop %v778
        %v811 = vrcp.pop %v779
        %v812 = vrcp.pop %v780
        %v813 = vrcp.pop %v781
        %v814 = vrcp.pop %v782
        %v815 = vrcp.pop %v783
        %v816 = vrcp.pop %v784
        %v817 = vrcp.pop %v785
        %v818 = vrcp.pop %v786
        %v819 = vrcp.pop %v787
        %v820 = vrcp.pop %v788
        %v821 = vsub.f32 %v510, %v210
        %v822 = vsub.f32 %v512, %v211
        %v823 = vsub.f32 %v623, %v212
        %v824 = vsub.f32 %v625, %v213
        %v825 = vsub.f32 %v514, %v214
        %v826 = vsub.f32 %v516, %v215
        %v827 = vsub.f32 %v627, %v216
        %v828 = vsub.f32 %v629, %v217
        %v829 = vsub.f32 %v520, %v218
        %v830 = vsub.f32 %v522, %v219
        %v831 = vsub.f32 %v633, %v220
        %v832 = vsub.f32 %v635, %v221
        %v833 = vsub.f32 %v524, %v222
        %v834 = vsub.f32 %v526, %v223
        %v835 = vsub.f32 %v637, %v224
        %v836 = vsub.f32 %v639, %v225
        %v837 = vsub.f32 %v530, %v226
        %v838 = vsub.f32 %v532, %v227
        %v839 = vsub.f32 %v643, %v228
        %v840 = vsub.f32 %v645, %v229
        %v841 = vsub.f32 %v534, %v230
        %v842 = vsub.f32 %v536, %v231
        %v843 = vsub.f32 %v647, %v232
        %v844 = vsub.f32 %v649, %v233
        %v845 = vsub.f32 %v540, %v234
        %v846 = vsub.f32 %v542, %v235
        %v847 = vsub.f32 %v653, %v236
        %v848 = vsub.f32 %v655, %v237
        %v849 = vsub.f32 %v544, %v238
        %v850 = vsub.f32 %v546, %v239
        %v851 = vsub.f32 %v657, %v240
        %v852 = vsub.f32 %v659, %v241
        %v853 = vmul.f32 %v789, %v821
        %v854 = vmul.f32 %v790, %v822
        %v855 = vmul.f32 %v791, %v823
        %v856 = vmul.f32 %v792, %v824
        %v857 = vmul.f32 %v793, %v825
        %v858 = vmul.f32 %v794, %v826
        %v859 = vmul.f32 %v795, %v827
        %v860 = vmul.f32 %v796, %v828
        %v861 = vmul.f32 %v797, %v829
        %v862 = vmul.f32 %v798, %v830
        %v863 = vmul.f32 %v799, %v831
        %v864 = vmul.f32 %v800, %v832
        %v865 = vmul.f32 %v801, %v833
        %v866 = vmul.f32 %v802, %v834
        %v867 = vmul.f32 %v803, %v835
        %v868 = vmul.f32 %v804, %v836
        %v869 = vmul.f32 %v805, %v837
        %v870 = vmul.f32 %v806, %v838
        %v871 = vmul.f32 %v807, %v839
        %v872 = vmul.f32 %v808, %v840
        %v873 = vmul.f32 %v809, %v841
        %v874 = vmul.f32 %v810, %v842
        %v875 = vmul.f32 %v811, %v843
        %v876 = vmul.f32 %v812, %v844
        %v877 = vmul.f32 %v813, %v845
        %v878 = vmul.f32 %v814, %v846
        %v879 = vmul.f32 %v815, %v847
        %v880 = vmul.f32 %v816, %v848
        %v881 = vmul.f32 %v817, %v849
        %v882 = vmul.f32 %v818, %v850
        %v883 = vmul.f32 %v819, %v851
        %v884 = vmul.f32 %v820, %v852
        %v885 = vadd.f32 %v210, %v853
        %v886 = vadd.f32 %v211, %v854
        %v887 = vadd.f32 %v212, %v855
        %v888 = vadd.f32 %v213, %v856
        %v889 = vadd.f32 %v214, %v857
        %v890 = vadd.f32 %v215, %v858
        %v891 = vadd.f32 %v216, %v859
        %v892 = vadd.f32 %v217, %v860
        %v893 = vadd.f32 %v218, %v861
        %v894 = vadd.f32 %v219, %v862
        %v895 = vadd.f32 %v220, %v863
        %v896 = vadd.f32 %v221, %v864
        %v897 = vadd.f32 %v222, %v865
        %v898 = vadd.f32 %v223, %v866
        %v899 = vadd.f32 %v224, %v867
        %v900 = vadd.f32 %v225, %v868
        %v901 = vadd.f32 %v226, %v869
        %v902 = vadd.f32 %v227, %v870
        %v903 = vadd.f32 %v228, %v871
        %v904 = vadd.f32 %v229, %v872
        %v905 = vadd.f32 %v230, %v873
        %v906 = vadd.f32 %v231, %v874
        %v907 = vadd.f32 %v232, %v875
        %v908 = vadd.f32 %v233, %v876
        %v909 = vadd.f32 %v234, %v877
        %v910 = vadd.f32 %v235, %v878
        %v911 = vadd.f32 %v236, %v879
        %v912 = vadd.f32 %v237, %v880
        %v913 = vadd.f32 %v238, %v881
        %v914 = vadd.f32 %v239, %v882
        %v915 = vadd.f32 %v240, %v883
        %v916 = vadd.f32 %v241, %v884
        %s917 = scalar_lea.vmem %s1, 64
        %v918 = vld [vmem:[%s917] sm:$0xf]
        %v919 = vld [vmem:[%s917 + $0x4] sm:$0xf]
        %v920 = vld [vmem:[%s917 + $0x8] sm:$0xf]
        %v921 = vld [vmem:[%s917 + $0xc] sm:$0xf]
        %v922 = vld [vmem:[%s917 + $0x10] sm:$0xf]
        %v923 = vld [vmem:[%s917 + $0x14] sm:$0xf]
        %v924 = vld [vmem:[%s917 + $0x18] sm:$0xf]
        %v925 = vld [vmem:[%s917 + $0x1c] sm:$0xf]
        %v926 = vld [vmem:[%s917 + $0x20] sm:$0xf]
        %v927 = vld [vmem:[%s917 + $0x24] sm:$0xf]
        %v928 = vld [vmem:[%s917 + $0x28] sm:$0xf]
        %v929 = vld [vmem:[%s917 + $0x2c] sm:$0xf]
        %v930 = vld [vmem:[%s917 + $0x30] sm:$0xf]
        %v931 = vld [vmem:[%s917 + $0x34] sm:$0xf]
        %v932 = vld [vmem:[%s917 + $0x38] sm:$0xf]
        %v933 = vld [vmem:[%s917 + $0x3c] sm:$0xf]
        %v934 = vpack.c.bf16 %v889, %v885
        %v935 = vpack.c.bf16 %v890, %v886
        %v936 = vpack.c.bf16 %v891, %v887
        %v937 = vpack.c.bf16 %v892, %v888
        %v938 = vpack.c.bf16 %v897, %v893
        %v939 = vpack.c.bf16 %v898, %v894
        %v940 = vpack.c.bf16 %v899, %v895
        %v941 = vpack.c.bf16 %v900, %v896
        %v942 = vpack.c.bf16 %v905, %v901
        %v943 = vpack.c.bf16 %v906, %v902
        %v944 = vpack.c.bf16 %v907, %v903
        %v945 = vpack.c.bf16 %v908, %v904
        %v946 = vpack.c.bf16 %v913, %v909
        %v947 = vpack.c.bf16 %v914, %v910
        %v948 = vpack.c.bf16 %v915, %v911
        %v949 = vpack.c.bf16 %v916, %v912
        %s950 = scalar_lea.vmem %s2, 128
        %v951 = vld [vmem:[%s950] sm:$0xff]
        %v952 = vld [vmem:[%s950 + $0x8] sm:$0xff]
        %v953 = vld [vmem:[%s950 + $0x10] sm:$0xff]
        %v954 = vld [vmem:[%s950 + $0x18] sm:$0xff]
        %v955 = vld [vmem:[%s950 + $0x20] sm:$0xff]
        %v956 = vld [vmem:[%s950 + $0x28] sm:$0xff]
        %v957 = vld [vmem:[%s950 + $0x30] sm:$0xff]
        %v958 = vld [vmem:[%s950 + $0x38] sm:$0xff]
        %v959 = vld [vmem:[%s950 + $0x40] sm:$0xff]
        %v960 = vld [vmem:[%s950 + $0x48] sm:$0xff]
        %v961 = vld [vmem:[%s950 + $0x50] sm:$0xff]
        %v962 = vld [vmem:[%s950 + $0x58] sm:$0xff]
        %v963 = vld [vmem:[%s950 + $0x60] sm:$0xff]
        %v964 = vld [vmem:[%s950 + $0x68] sm:$0xff]
        %v965 = vld [vmem:[%s950 + $0x70] sm:$0xff]
        %v966 = vld [vmem:[%s950 + $0x78] sm:$0xff]
        %968 = vset.pattern.permute.xlu0 0
        %969 = vperm.xlu0 %968, %v951
        %v970 = vpop.permute.xlu0 %969
        %973 = vset.pattern.permute.xlu0 0
        %974 = vperm.xlu0 %973, %v952
        %v975 = vpop.permute.xlu0 %974
        %978 = vset.pattern.permute.xlu0 0
        %979 = vperm.xlu0 %978, %v953
        %v980 = vpop.permute.xlu0 %979
        %983 = vset.pattern.permute.xlu0 0
        %984 = vperm.xlu0 %983, %v954
        %v985 = vpop.permute.xlu0 %984
        %988 = vset.pattern.permute.xlu0 0
        %989 = vperm.xlu0 %988, %v955
        %v990 = vpop.permute.xlu0 %989
        %993 = vset.pattern.permute.xlu0 0
        %994 = vperm.xlu0 %993, %v956
        %v995 = vpop.permute.xlu0 %994
        %998 = vset.pattern.permute.xlu0 0
        %999 = vperm.xlu0 %998, %v957
        %v1000 = vpop.permute.xlu0 %999
        %1003 = vset.pattern.permute.xlu0 0
        %1004 = vperm.xlu0 %1003, %v958
        %v1005 = vpop.permute.xlu0 %1004
        %1008 = vset.pattern.permute.xlu0 0
        %1009 = vperm.xlu0 %1008, %v959
        %v1010 = vpop.permute.xlu0 %1009
        %1013 = vset.pattern.permute.xlu0 0
        %1014 = vperm.xlu0 %1013, %v960
        %v1015 = vpop.permute.xlu0 %1014
        %1018 = vset.pattern.permute.xlu0 0
        %1019 = vperm.xlu0 %1018, %v961
        %v1020 = vpop.permute.xlu0 %1019
        %1023 = vset.pattern.permute.xlu0 0
        %1024 = vperm.xlu0 %1023, %v962
        %v1025 = vpop.permute.xlu0 %1024
        %1028 = vset.pattern.permute.xlu0 0
        %1029 = vperm.xlu0 %1028, %v963
        %v1030 = vpop.permute.xlu0 %1029
        %1033 = vset.pattern.permute.xlu0 0
        %1034 = vperm.xlu0 %1033, %v964
        %v1035 = vpop.permute.xlu0 %1034
        %1038 = vset.pattern.permute.xlu0 0
        %1039 = vperm.xlu0 %1038, %v965
        %v1040 = vpop.permute.xlu0 %1039
        %1043 = vset.pattern.permute.xlu0 0
        %1044 = vperm.xlu0 %1043, %v966
        %v1045 = vpop.permute.xlu0 %1044
        %v1063 = vunpack.c.l.b16 %v918
        %v1064 = vunpack.c.l.b16 %v919
        %v1065 = vunpack.c.l.b16 %v920
        %v1066 = vunpack.c.l.b16 %v921
        %v1067 = vunpack.c.l.b16 %v922
        %v1068 = vunpack.c.l.b16 %v923
        %v1069 = vunpack.c.l.b16 %v924
        %v1070 = vunpack.c.l.b16 %v925
        %v1071 = vunpack.c.l.b16 %v926
        %v1072 = vunpack.c.l.b16 %v927
        %v1073 = vunpack.c.l.b16 %v928
        %v1074 = vunpack.c.l.b16 %v929
        %v1075 = vunpack.c.l.b16 %v930
        %v1076 = vunpack.c.l.b16 %v931
        %v1077 = vunpack.c.l.b16 %v932
        %v1078 = vunpack.c.l.b16 %v933
        %v1079 = vpack.c.b16 %v1064, %v1063
        %v1080 = vpack.c.b16 %v1066, %v1065
        %v1081 = vpack.c.b16 %v1068, %v1067
        %v1082 = vpack.c.b16 %v1070, %v1069
        %v1083 = vpack.c.b16 %v1072, %v1071
        %v1084 = vpack.c.b16 %v1074, %v1073
        %v1085 = vpack.c.b16 %v1076, %v1075
        %v1086 = vpack.c.b16 %v1078, %v1077
        %v1088 = vsel %vm410, %v1079, 0
        %v1091 = vsel %vm410, %v1080, 0
        %v1094 = vsel %vm410, %v1081, 0
        %v1097 = vsel %vm410, %v1082, 0
        %v1100 = vsel %vm410, %v1083, 0
        %v1103 = vsel %vm410, %v1084, 0
        %v1106 = vsel %vm410, %v1085, 0
        %v1109 = vsel %vm410, %v1086, 0
        %1111 = vmatprep.subr.bf16.mxu0 %v935
        %1112 = vmatpush1.bf16.msra.mxu0 %v934
        %1113 = vmatprep.subr.bf16.mxu0 %v939
        %1114 = vmatpush1.bf16.msra.mxu0 %v938
        %1115 = vmatprep.subr.bf16.mxu0 %v943
        %1116 = vmatpush1.bf16.msra.mxu0 %v942
        %1117 = vmatprep.subr.bf16.mxu0 %v947
        %1118 = vmatpush1.bf16.msra.mxu0 %v946
        %1119 = vmatprep.subr.bf16.mxu0 0
        %1120 = vmatpush1.bf16.msra.mxu0 0
        %1121 = vmatprep.subr.bf16.mxu0 0
        %1122 = vmatpush1.bf16.msra.mxu0 0
        %1123 = vmatprep.subr.bf16.mxu0 0
        %1124 = vmatpush1.bf16.msra.mxu0 0
        %1125 = vmatprep.subr.bf16.mxu0 0
        %1126 = vmatpush1.bf16.msra.mxu0 0
        %1127 = vmatprep.subr.bf16.mxu0 0
        %1128 = vmatpush1.bf16.msra.mxu0 0
        %1129 = vmatprep.subr.bf16.mxu0 0
        %1130 = vmatpush1.bf16.msra.mxu0 0
        %1131 = vmatprep.subr.bf16.mxu0 0
        %1132 = vmatpush1.bf16.msra.mxu0 0
        %1133 = vmatprep.subr.bf16.mxu0 0
        %1134 = vmatpush1.bf16.msra.mxu0 0
        %1135 = vmatprep.subr.bf16.mxu0 0
        %1136 = vmatpush1.bf16.msra.mxu0 0
        %1137 = vmatprep.subr.bf16.mxu0 0
        %1138 = vmatpush1.bf16.msra.mxu0 0
        %1139 = vmatprep.subr.bf16.mxu0 0
        %1140 = vmatpush1.bf16.msra.mxu0 0
        %1141 = vmatprep.subr.bf16.mxu0 0
        %1142 = vmatpush1.bf16.msra.mxu0 0
        %1143 = vmatprep.mubr.bf16.mxu0 0
        %1144 = vmatmul.mubr.bf16.gmra.mrb[0].mxu0 %v1088
        %v1145 = vpop.f32.mrb[0].mxu0
        %v1146 = vadd.f32 %v970, %v1145
        %v1147 = vpop.f32.mrb[0].mxu0
        %v1148 = vadd.f32 %v970, %v1147
        %v1149 = vpop.f32.mrb[0].mxu0
        %v1150 = vadd.f32 %v975, %v1149
        %v1151 = vpop.f32.mrb[0].mxu0
        %v1152 = vadd.f32 %v975, %v1151
        %1153 = vmatprep.mubr.bf16.mxu0 0
        %1154 = vmatmul.mubr.bf16.gmra.mrb[0].mxu0 %v1091
        %v1155 = vpop.f32.mrb[0].mxu0
        %v1156 = vadd.f32 %v980, %v1155
        %v1157 = vpop.f32.mrb[0].mxu0
        %v1158 = vadd.f32 %v980, %v1157
        %v1159 = vpop.f32.mrb[0].mxu0
        %v1160 = vadd.f32 %v985, %v1159
        %v1161 = vpop.f32.mrb[0].mxu0
        %v1162 = vadd.f32 %v985, %v1161
        %1163 = vmatprep.mubr.bf16.mxu0 0
        %1164 = vmatmul.mubr.bf16.gmra.mrb[0].mxu0 %v1094
        %v1165 = vpop.f32.mrb[0].mxu0
        %v1166 = vadd.f32 %v990, %v1165
        %v1167 = vpop.f32.mrb[0].mxu0
        %v1168 = vadd.f32 %v990, %v1167
        %v1169 = vpop.f32.mrb[0].mxu0
        %v1170 = vadd.f32 %v995, %v1169
        %v1171 = vpop.f32.mrb[0].mxu0
        %v1172 = vadd.f32 %v995, %v1171
        %1173 = vmatprep.mubr.bf16.mxu0 0
        %1174 = vmatmul.mubr.bf16.gmra.mrb[0].mxu0 %v1097
        %v1175 = vpop.f32.mrb[0].mxu0
        %v1176 = vadd.f32 %v1000, %v1175
        %v1177 = vpop.f32.mrb[0].mxu0
        %v1178 = vadd.f32 %v1000, %v1177
        %v1179 = vpop.f32.mrb[0].mxu0
        %v1180 = vadd.f32 %v1005, %v1179
        %v1181 = vpop.f32.mrb[0].mxu0
        %v1182 = vadd.f32 %v1005, %v1181
        %1183 = vmatprep.mubr.bf16.mxu0 0
        %1184 = vmatmul.mubr.bf16.gmra.mrb[0].mxu0 %v1100
        %v1185 = vpop.f32.mrb[0].mxu0
        %v1186 = vadd.f32 %v1010, %v1185
        %v1187 = vpop.f32.mrb[0].mxu0
        %v1188 = vadd.f32 %v1010, %v1187
        %v1189 = vpop.f32.mrb[0].mxu0
        %v1190 = vadd.f32 %v1015, %v1189
        %v1191 = vpop.f32.mrb[0].mxu0
        %v1192 = vadd.f32 %v1015, %v1191
        %1193 = vmatprep.mubr.bf16.mxu0 0
        %1194 = vmatmul.mubr.bf16.gmra.mrb[0].mxu0 %v1103
        %v1195 = vpop.f32.mrb[0].mxu0
        %v1196 = vadd.f32 %v1020, %v1195
        %v1197 = vpop.f32.mrb[0].mxu0
        %v1198 = vadd.f32 %v1020, %v1197
        %v1199 = vpop.f32.mrb[0].mxu0
        %v1200 = vadd.f32 %v1025, %v1199
        %v1201 = vpop.f32.mrb[0].mxu0
        %v1202 = vadd.f32 %v1025, %v1201
        %1203 = vmatprep.mubr.bf16.mxu0 0
        %1204 = vmatmul.mubr.bf16.gmra.mrb[0].mxu0 %v1106
        %v1205 = vpop.f32.mrb[0].mxu0
        %v1206 = vadd.f32 %v1030, %v1205
        %v1207 = vpop.f32.mrb[0].mxu0
        %v1208 = vadd.f32 %v1030, %v1207
        %v1209 = vpop.f32.mrb[0].mxu0
        %v1210 = vadd.f32 %v1035, %v1209
        %v1211 = vpop.f32.mrb[0].mxu0
        %v1212 = vadd.f32 %v1035, %v1211
        %1213 = vmatprep.mubr.bf16.mxu0 0
        %1214 = vmatmul.mubr.bf16.gmra.mrb[0].mxu0 %v1109
        %v1215 = vpop.f32.mrb[0].mxu0
        %v1216 = vadd.f32 %v1040, %v1215
        %v1217 = vpop.f32.mrb[0].mxu0
        %v1218 = vadd.f32 %v1040, %v1217
        %v1219 = vpop.f32.mrb[0].mxu0
        %v1220 = vadd.f32 %v1045, %v1219
        %v1221 = vpop.f32.mrb[0].mxu0
        %v1222 = vadd.f32 %v1045, %v1221
        %1223 = vdwg.mxu0
        %1224 = vmatprep.subr.bf16.mxu0 %v937
        %1225 = vmatpush1.bf16.msra.mxu0 %v936
        %1226 = vmatprep.subr.bf16.mxu0 %v941
        %1227 = vmatpush1.bf16.msra.mxu0 %v940
        %1228 = vmatprep.subr.bf16.mxu0 %v945
        %1229 = vmatpush1.bf16.msra.mxu0 %v944
        %1230 = vmatprep.subr.bf16.mxu0 %v949
        %1231 = vmatpush1.bf16.msra.mxu0 %v948
        %1232 = vmatprep.subr.bf16.mxu0 0
        %1233 = vmatpush1.bf16.msra.mxu0 0
        %1234 = vmatprep.subr.bf16.mxu0 0
        %1235 = vmatpush1.bf16.msra.mxu0 0
        %1236 = vmatprep.subr.bf16.mxu0 0
        %1237 = vmatpush1.bf16.msra.mxu0 0
        %1238 = vmatprep.subr.bf16.mxu0 0
        %1239 = vmatpush1.bf16.msra.mxu0 0
        %1240 = vmatprep.subr.bf16.mxu0 0
        %1241 = vmatpush1.bf16.msra.mxu0 0
        %1242 = vmatprep.subr.bf16.mxu0 0
        %1243 = vmatpush1.bf16.msra.mxu0 0
        %1244 = vmatprep.subr.bf16.mxu0 0
        %1245 = vmatpush1.bf16.msra.mxu0 0
        %1246 = vmatprep.subr.bf16.mxu0 0
        %1247 = vmatpush1.bf16.msra.mxu0 0
        %1248 = vmatprep.subr.bf16.mxu0 0
        %1249 = vmatpush1.bf16.msra.mxu0 0
        %1250 = vmatprep.subr.bf16.mxu0 0
        %1251 = vmatpush1.bf16.msra.mxu0 0
        %1252 = vmatprep.subr.bf16.mxu0 0
        %1253 = vmatpush1.bf16.msra.mxu0 0
        %1254 = vmatprep.subr.bf16.mxu0 0
        %1255 = vmatpush1.bf16.msra.mxu0 0
        %1256 = vmatprep.mubr.bf16.mxu0 0
        %1257 = vmatmul.mubr.bf16.gmra.mrb[0].mxu0 %v1088
        %v1258 = vpop.f32.mrb[0].mxu0
        %v1259 = vadd.f32 %v970, %v1258
        %v1260 = vpop.f32.mrb[0].mxu0
        %v1261 = vadd.f32 %v970, %v1260
        %v1262 = vpop.f32.mrb[0].mxu0
        %v1263 = vadd.f32 %v975, %v1262
        %v1264 = vpop.f32.mrb[0].mxu0
        %v1265 = vadd.f32 %v975, %v1264
        %1266 = vmatprep.mubr.bf16.mxu0 0
        %1267 = vmatmul.mubr.bf16.gmra.mrb[0].mxu0 %v1091
        %v1268 = vpop.f32.mrb[0].mxu0
        %v1269 = vadd.f32 %v980, %v1268
        %v1270 = vpop.f32.mrb[0].mxu0
        %v1271 = vadd.f32 %v980, %v1270
        %v1272 = vpop.f32.mrb[0].mxu0
        %v1273 = vadd.f32 %v985, %v1272
        %v1274 = vpop.f32.mrb[0].mxu0
        %v1275 = vadd.f32 %v985, %v1274
        %1276 = vmatprep.mubr.bf16.mxu0 0
        %1277 = vmatmul.mubr.bf16.gmra.mrb[0].mxu0 %v1094
        %v1278 = vpop.f32.mrb[0].mxu0
        %v1279 = vadd.f32 %v990, %v1278
        %v1280 = vpop.f32.mrb[0].mxu0
        %v1281 = vadd.f32 %v990, %v1280
        %v1282 = vpop.f32.mrb[0].mxu0
        %v1283 = vadd.f32 %v995, %v1282
        %v1284 = vpop.f32.mrb[0].mxu0
        %v1285 = vadd.f32 %v995, %v1284
        %1286 = vmatprep.mubr.bf16.mxu0 0
        %1287 = vmatmul.mubr.bf16.gmra.mrb[0].mxu0 %v1097
        %v1288 = vpop.f32.mrb[0].mxu0
        %v1289 = vadd.f32 %v1000, %v1288
        %v1290 = vpop.f32.mrb[0].mxu0
        %v1291 = vadd.f32 %v1000, %v1290
        %v1292 = vpop.f32.mrb[0].mxu0
        %v1293 = vadd.f32 %v1005, %v1292
        %v1294 = vpop.f32.mrb[0].mxu0
        %v1295 = vadd.f32 %v1005, %v1294
        %1296 = vmatprep.mubr.bf16.mxu0 0
        %1297 = vmatmul.mubr.bf16.gmra.mrb[0].mxu0 %v1100
        %v1298 = vpop.f32.mrb[0].mxu0
        %v1299 = vadd.f32 %v1010, %v1298
        %v1300 = vpop.f32.mrb[0].mxu0
        %v1301 = vadd.f32 %v1010, %v1300
        %v1302 = vpop.f32.mrb[0].mxu0
        %v1303 = vadd.f32 %v1015, %v1302
        %v1304 = vpop.f32.mrb[0].mxu0
        %v1305 = vadd.f32 %v1015, %v1304
        %1306 = vmatprep.mubr.bf16.mxu0 0
        %1307 = vmatmul.mubr.bf16.gmra.mrb[0].mxu0 %v1103
        %v1308 = vpop.f32.mrb[0].mxu0
        %v1309 = vadd.f32 %v1020, %v1308
        %v1310 = vpop.f32.mrb[0].mxu0
        %v1311 = vadd.f32 %v1020, %v1310
        %v1312 = vpop.f32.mrb[0].mxu0
        %v1313 = vadd.f32 %v1025, %v1312
        %v1314 = vpop.f32.mrb[0].mxu0
        %v1315 = vadd.f32 %v1025, %v1314
        %1316 = vmatprep.mubr.bf16.mxu0 0
        %1317 = vmatmul.mubr.bf16.gmra.mrb[0].mxu0 %v1106
        %v1318 = vpop.f32.mrb[0].mxu0
        %v1319 = vadd.f32 %v1030, %v1318
        %v1320 = vpop.f32.mrb[0].mxu0
        %v1321 = vadd.f32 %v1030, %v1320
        %v1322 = vpop.f32.mrb[0].mxu0
        %v1323 = vadd.f32 %v1035, %v1322
        %v1324 = vpop.f32.mrb[0].mxu0
        %v1325 = vadd.f32 %v1035, %v1324
        %1326 = vmatprep.mubr.bf16.mxu0 0
        %1327 = vmatmul.mubr.bf16.gmra.mrb[0].mxu0 %v1109
        %v1328 = vpop.f32.mrb[0].mxu0
        %v1329 = vadd.f32 %v1040, %v1328
        %v1330 = vpop.f32.mrb[0].mxu0
        %v1331 = vadd.f32 %v1040, %v1330
        %v1332 = vpop.f32.mrb[0].mxu0
        %v1333 = vadd.f32 %v1045, %v1332
        %v1334 = vpop.f32.mrb[0].mxu0
        %v1335 = vadd.f32 %v1045, %v1334
        %1336 = vdwg.mxu0
        %v1337 = vsub.f32 0.0, %v1146
        %v1338 = vsub.f32 0.0, %v1148
        %v1339 = vsub.f32 0.0, %v1259
        %v1340 = vsub.f32 0.0, %v1261
        %v1341 = vsub.f32 0.0, %v1150
        %v1342 = vsub.f32 0.0, %v1152
        %v1343 = vsub.f32 0.0, %v1263
        %v1344 = vsub.f32 0.0, %v1265
        %v1345 = vsub.f32 0.0, %v1156
        %v1346 = vsub.f32 0.0, %v1158
        %v1347 = vsub.f32 0.0, %v1269
        %v1348 = vsub.f32 0.0, %v1271
        %v1349 = vsub.f32 0.0, %v1160
        %v1350 = vsub.f32 0.0, %v1162
        %v1351 = vsub.f32 0.0, %v1273
        %v1352 = vsub.f32 0.0, %v1275
        %v1353 = vsub.f32 0.0, %v1166
        %v1354 = vsub.f32 0.0, %v1168
        %v1355 = vsub.f32 0.0, %v1279
        %v1356 = vsub.f32 0.0, %v1281
        %v1357 = vsub.f32 0.0, %v1170
        %v1358 = vsub.f32 0.0, %v1172
        %v1359 = vsub.f32 0.0, %v1283
        %v1360 = vsub.f32 0.0, %v1285
        %v1361 = vsub.f32 0.0, %v1176
        %v1362 = vsub.f32 0.0, %v1178
        %v1363 = vsub.f32 0.0, %v1289
        %v1364 = vsub.f32 0.0, %v1291
        %v1365 = vsub.f32 0.0, %v1180
        %v1366 = vsub.f32 0.0, %v1182
        %v1367 = vsub.f32 0.0, %v1293
        %v1368 = vsub.f32 0.0, %v1295
        %v1369 = vmul.f32 %v1337, 1.442695
        %v1370 = vpow.pop %v1369
        %v1371 = vmul.f32 %v1338, 1.442695
        %v1372 = vpow.pop %v1371
        %v1373 = vmul.f32 %v1339, 1.442695
        %v1374 = vpow.pop %v1373
        %v1375 = vmul.f32 %v1340, 1.442695
        %v1376 = vpow.pop %v1375
        %v1377 = vmul.f32 %v1341, 1.442695
        %v1378 = vpow.pop %v1377
        %v1379 = vmul.f32 %v1342, 1.442695
        %v1380 = vpow.pop %v1379
        %v1381 = vmul.f32 %v1343, 1.442695
        %v1382 = vpow.pop %v1381
        %v1383 = vmul.f32 %v1344, 1.442695
        %v1384 = vpow.pop %v1383
        %v1385 = vmul.f32 %v1345, 1.442695
        %v1386 = vpow.pop %v1385
        %v1387 = vmul.f32 %v1346, 1.442695
        %v1388 = vpow.pop %v1387
        %v1389 = vmul.f32 %v1347, 1.442695
        %v1390 = vpow.pop %v1389
        %v1391 = vmul.f32 %v1348, 1.442695
        %v1392 = vpow.pop %v1391
        %v1393 = vmul.f32 %v1349, 1.442695
        %v1394 = vpow.pop %v1393
        %v1395 = vmul.f32 %v1350, 1.442695
        %v1396 = vpow.pop %v1395
        %v1397 = vmul.f32 %v1351, 1.442695
        %v1398 = vpow.pop %v1397
        %v1399 = vmul.f32 %v1352, 1.442695
        %v1400 = vpow.pop %v1399
        %v1401 = vmul.f32 %v1353, 1.442695
        %v1402 = vpow.pop %v1401
        %v1403 = vmul.f32 %v1354, 1.442695
        %v1404 = vpow.pop %v1403
        %v1405 = vmul.f32 %v1355, 1.442695
        %v1406 = vpow.pop %v1405
        %v1407 = vmul.f32 %v1356, 1.442695
        %v1408 = vpow.pop %v1407
        %v1409 = vmul.f32 %v1357, 1.442695
        %v1410 = vpow.pop %v1409
        %v1411 = vmul.f32 %v1358, 1.442695
        %v1412 = vpow.pop %v1411
        %v1413 = vmul.f32 %v1359, 1.442695
        %v1414 = vpow.pop %v1413
        %v1415 = vmul.f32 %v1360, 1.442695
        %v1416 = vpow.pop %v1415
        %v1417 = vmul.f32 %v1361, 1.442695
        %v1418 = vpow.pop %v1417
        %v1419 = vmul.f32 %v1362, 1.442695
        %v1420 = vpow.pop %v1419
        %v1421 = vmul.f32 %v1363, 1.442695
        %v1422 = vpow.pop %v1421
        %v1423 = vmul.f32 %v1364, 1.442695
        %v1424 = vpow.pop %v1423
        %v1425 = vmul.f32 %v1365, 1.442695
        %v1426 = vpow.pop %v1425
        %v1427 = vmul.f32 %v1366, 1.442695
        %v1428 = vpow.pop %v1427
        %v1429 = vmul.f32 %v1367, 1.442695
        %v1430 = vpow.pop %v1429
        %v1431 = vmul.f32 %v1368, 1.442695
        %v1432 = vpow.pop %v1431
        %v1433 = vadd.f32 %v1370, 1.0
        %v1434 = vadd.f32 %v1372, 1.0
        %v1435 = vadd.f32 %v1374, 1.0
        %v1436 = vadd.f32 %v1376, 1.0
        %v1437 = vadd.f32 %v1378, 1.0
        %v1438 = vadd.f32 %v1380, 1.0
        %v1439 = vadd.f32 %v1382, 1.0
        %v1440 = vadd.f32 %v1384, 1.0
        %v1441 = vadd.f32 %v1386, 1.0
        %v1442 = vadd.f32 %v1388, 1.0
        %v1443 = vadd.f32 %v1390, 1.0
        %v1444 = vadd.f32 %v1392, 1.0
        %v1445 = vadd.f32 %v1394, 1.0
        %v1446 = vadd.f32 %v1396, 1.0
        %v1447 = vadd.f32 %v1398, 1.0
        %v1448 = vadd.f32 %v1400, 1.0
        %v1449 = vadd.f32 %v1402, 1.0
        %v1450 = vadd.f32 %v1404, 1.0
        %v1451 = vadd.f32 %v1406, 1.0
        %v1452 = vadd.f32 %v1408, 1.0
        %v1453 = vadd.f32 %v1410, 1.0
        %v1454 = vadd.f32 %v1412, 1.0
        %v1455 = vadd.f32 %v1414, 1.0
        %v1456 = vadd.f32 %v1416, 1.0
        %v1457 = vadd.f32 %v1418, 1.0
        %v1458 = vadd.f32 %v1420, 1.0
        %v1459 = vadd.f32 %v1422, 1.0
        %v1460 = vadd.f32 %v1424, 1.0
        %v1461 = vadd.f32 %v1426, 1.0
        %v1462 = vadd.f32 %v1428, 1.0
        %v1463 = vadd.f32 %v1430, 1.0
        %v1464 = vadd.f32 %v1432, 1.0
        %v1465 = vrcp.pop %v1433
        %v1466 = vrcp.pop %v1434
        %v1467 = vrcp.pop %v1435
        %v1468 = vrcp.pop %v1436
        %v1469 = vrcp.pop %v1437
        %v1470 = vrcp.pop %v1438
        %v1471 = vrcp.pop %v1439
        %v1472 = vrcp.pop %v1440
        %v1473 = vrcp.pop %v1441
        %v1474 = vrcp.pop %v1442
        %v1475 = vrcp.pop %v1443
        %v1476 = vrcp.pop %v1444
        %v1477 = vrcp.pop %v1445
        %v1478 = vrcp.pop %v1446
        %v1479 = vrcp.pop %v1447
        %v1480 = vrcp.pop %v1448
        %v1481 = vrcp.pop %v1449
        %v1482 = vrcp.pop %v1450
        %v1483 = vrcp.pop %v1451
        %v1484 = vrcp.pop %v1452
        %v1485 = vrcp.pop %v1453
        %v1486 = vrcp.pop %v1454
        %v1487 = vrcp.pop %v1455
        %v1488 = vrcp.pop %v1456
        %v1489 = vrcp.pop %v1457
        %v1490 = vrcp.pop %v1458
        %v1491 = vrcp.pop %v1459
        %v1492 = vrcp.pop %v1460
        %v1493 = vrcp.pop %v1461
        %v1494 = vrcp.pop %v1462
        %v1495 = vrcp.pop %v1463
        %v1496 = vrcp.pop %v1464
        %v1497 = vsub.f32 %v1186, %v885
        %v1498 = vsub.f32 %v1188, %v886
        %v1499 = vsub.f32 %v1299, %v887
        %v1500 = vsub.f32 %v1301, %v888
        %v1501 = vsub.f32 %v1190, %v889
        %v1502 = vsub.f32 %v1192, %v890
        %v1503 = vsub.f32 %v1303, %v891
        %v1504 = vsub.f32 %v1305, %v892
        %v1505 = vsub.f32 %v1196, %v893
        %v1506 = vsub.f32 %v1198, %v894
        %v1507 = vsub.f32 %v1309, %v895
        %v1508 = vsub.f32 %v1311, %v896
        %v1509 = vsub.f32 %v1200, %v897
        %v1510 = vsub.f32 %v1202, %v898
        %v1511 = vsub.f32 %v1313, %v899
        %v1512 = vsub.f32 %v1315, %v900
        %v1513 = vsub.f32 %v1206, %v901
        %v1514 = vsub.f32 %v1208, %v902
        %v1515 = vsub.f32 %v1319, %v903
        %v1516 = vsub.f32 %v1321, %v904
        %v1517 = vsub.f32 %v1210, %v905
        %v1518 = vsub.f32 %v1212, %v906
        %v1519 = vsub.f32 %v1323, %v907
        %v1520 = vsub.f32 %v1325, %v908
        %v1521 = vsub.f32 %v1216, %v909
        %v1522 = vsub.f32 %v1218, %v910
        %v1523 = vsub.f32 %v1329, %v911
        %v1524 = vsub.f32 %v1331, %v912
        %v1525 = vsub.f32 %v1220, %v913
        %v1526 = vsub.f32 %v1222, %v914
        %v1527 = vsub.f32 %v1333, %v915
        %v1528 = vsub.f32 %v1335, %v916
        %v1529 = vmul.f32 %v1465, %v1497
        %v1530 = vmul.f32 %v1466, %v1498
        %v1531 = vmul.f32 %v1467, %v1499
        %v1532 = vmul.f32 %v1468, %v1500
        %v1533 = vmul.f32 %v1469, %v1501
        %v1534 = vmul.f32 %v1470, %v1502
        %v1535 = vmul.f32 %v1471, %v1503
        %v1536 = vmul.f32 %v1472, %v1504
        %v1537 = vmul.f32 %v1473, %v1505
        %v1538 = vmul.f32 %v1474, %v1506
        %v1539 = vmul.f32 %v1475, %v1507
        %v1540 = vmul.f32 %v1476, %v1508
        %v1541 = vmul.f32 %v1477, %v1509
        %v1542 = vmul.f32 %v1478, %v1510
        %v1543 = vmul.f32 %v1479, %v1511
        %v1544 = vmul.f32 %v1480, %v1512
        %v1545 = vmul.f32 %v1481, %v1513
        %v1546 = vmul.f32 %v1482, %v1514
        %v1547 = vmul.f32 %v1483, %v1515
        %v1548 = vmul.f32 %v1484, %v1516
        %v1549 = vmul.f32 %v1485, %v1517
        %v1550 = vmul.f32 %v1486, %v1518
        %v1551 = vmul.f32 %v1487, %v1519
        %v1552 = vmul.f32 %v1488, %v1520
        %v1553 = vmul.f32 %v1489, %v1521
        %v1554 = vmul.f32 %v1490, %v1522
        %v1555 = vmul.f32 %v1491, %v1523
        %v1556 = vmul.f32 %v1492, %v1524
        %v1557 = vmul.f32 %v1493, %v1525
        %v1558 = vmul.f32 %v1494, %v1526
        %v1559 = vmul.f32 %v1495, %v1527
        %v1560 = vmul.f32 %v1496, %v1528
        %v1561 = vadd.f32 %v885, %v1529
        %v1562 = vadd.f32 %v886, %v1530
        %v1563 = vadd.f32 %v887, %v1531
        %v1564 = vadd.f32 %v888, %v1532
        %v1565 = vadd.f32 %v889, %v1533
        %v1566 = vadd.f32 %v890, %v1534
        %v1567 = vadd.f32 %v891, %v1535
        %v1568 = vadd.f32 %v892, %v1536
        %v1569 = vadd.f32 %v893, %v1537
        %v1570 = vadd.f32 %v894, %v1538
        %v1571 = vadd.f32 %v895, %v1539
        %v1572 = vadd.f32 %v896, %v1540
        %v1573 = vadd.f32 %v897, %v1541
        %v1574 = vadd.f32 %v898, %v1542
        %v1575 = vadd.f32 %v899, %v1543
        %v1576 = vadd.f32 %v900, %v1544
        %v1577 = vadd.f32 %v901, %v1545
        %v1578 = vadd.f32 %v902, %v1546
        %v1579 = vadd.f32 %v903, %v1547
        %v1580 = vadd.f32 %v904, %v1548
        %v1581 = vadd.f32 %v905, %v1549
        %v1582 = vadd.f32 %v906, %v1550
        %v1583 = vadd.f32 %v907, %v1551
        %v1584 = vadd.f32 %v908, %v1552
        %v1585 = vadd.f32 %v909, %v1553
        %v1586 = vadd.f32 %v910, %v1554
        %v1587 = vadd.f32 %v911, %v1555
        %v1588 = vadd.f32 %v912, %v1556
        %v1589 = vadd.f32 %v913, %v1557
        %v1590 = vadd.f32 %v914, %v1558
        %v1591 = vadd.f32 %v915, %v1559
        %v1592 = vadd.f32 %v916, %v1560
        %1593 = vst [vmem:[%s206] sm:$0xff] %v1561
        %1594 = vst [vmem:[%s206 + $0x8] sm:$0xff] %v1562
        %1595 = vst [vmem:[%s206 + $0x10] sm:$0xff] %v1563
        %1596 = vst [vmem:[%s206 + $0x18] sm:$0xff] %v1564
        %1597 = vst [vmem:[%s206 + $0x20] sm:$0xff] %v1565
        %1598 = vst [vmem:[%s206 + $0x28] sm:$0xff] %v1566
        %1599 = vst [vmem:[%s206 + $0x30] sm:$0xff] %v1567
        %1600 = vst [vmem:[%s206 + $0x38] sm:$0xff] %v1568
        %1601 = vst [vmem:[%s206 + $0x40] sm:$0xff] %v1569
        %1602 = vst [vmem:[%s206 + $0x48] sm:$0xff] %v1570
        %1603 = vst [vmem:[%s206 + $0x50] sm:$0xff] %v1571
        %1604 = vst [vmem:[%s206 + $0x58] sm:$0xff] %v1572
        %1605 = vst [vmem:[%s206 + $0x60] sm:$0xff] %v1573
        %1606 = vst [vmem:[%s206 + $0x68] sm:$0xff] %v1574
        %1607 = vst [vmem:[%s206 + $0x70] sm:$0xff] %v1575
        %1608 = vst [vmem:[%s206 + $0x78] sm:$0xff] %v1576
        %1609 = vst [vmem:[%s206 + $0x80] sm:$0xff] %v1577
        %1610 = vst [vmem:[%s206 + $0x88] sm:$0xff] %v1578
        %1611 = vst [vmem:[%s206 + $0x90] sm:$0xff] %v1579
        %1612 = vst [vmem:[%s206 + $0x98] sm:$0xff] %v1580
        %1613 = vst [vmem:[%s206 + $0xa0] sm:$0xff] %v1581
        %1614 = vst [vmem:[%s206 + $0xa8] sm:$0xff] %v1582
        %1615 = vst [vmem:[%s206 + $0xb0] sm:$0xff] %v1583
        %1616 = vst [vmem:[%s206 + $0xb8] sm:$0xff] %v1584
        %1617 = vst [vmem:[%s206 + $0xc0] sm:$0xff] %v1585
        %1618 = vst [vmem:[%s206 + $0xc8] sm:$0xff] %v1586
        %1619 = vst [vmem:[%s206 + $0xd0] sm:$0xff] %v1587
        %1620 = vst [vmem:[%s206 + $0xd8] sm:$0xff] %v1588
        %1621 = vst [vmem:[%s206 + $0xe0] sm:$0xff] %v1589
        %1622 = vst [vmem:[%s206 + $0xe8] sm:$0xff] %v1590
        %1623 = vst [vmem:[%s206 + $0xf0] sm:$0xff] %v1591
        %1624 = vst [vmem:[%s206 + $0xf8] sm:$0xff] %v1592
        %s1625 = sand.u32 %s112, 1
        %s1626 = scalar_lea.sflag [#allocation4], %s1625
        %s1627 = sand.u32 %s112, 1
        %s1628 = smul.addr %s1627, 256
        %s1629 = scalar_lea.vmem [#allocation5], %s1628
        // Predicated region
        $region37: #{tpu_custom_call.1} parent=31 // pred_check
          %p1630 = pneg %p122
        $region38: #{tpu_custom_call.1} parent=31 // pred_check_branch
          %1632 = sbr.rel (%p1630) target = $region40
        $region39: #{tpu_custom_call.1} parent=31 // pred_region
          %s1633 = smul.u32 4, %s25
          %s1635 = ssub.s32 4096, 4096
          %1636 = vsyncadd %s1626, %s1635
          %s1637 = smul.addr %s24, 32
          %s1638 = sadd.s32 %s1633, %s1637
          %s1639 = smul.addr %s1638, 128
          %s1640 = scalar_lea.hbm %s3, %s1639
          %s1641 = sshll.u32 %s1629, 4
          %s1642 = int_to_ptr.vmem [resolvable:$true] %s1641
          %1647 = dma.vmem_to_hbm [thread:$0]  %s1642, 4096, %s1640, %s1626, 512, 512, 32
        $region40: #{tpu_custom_call.1} parent=31 // pred_fallthru
          _
      $region32: #{tpu_custom_call.1} parent=5 // pred_fallthru
        _
      %p1648 = scmp.le.s32.totalorder 2, %s15
      // Predicated region
      $region41: #{tpu_custom_call.1} parent=5 // pred_check
        %p1649 = pneg %p1648
      $region42: #{tpu_custom_call.1} parent=5 // pred_check_branch
        %1651 = sbr.rel (%p1649) target = $region44
      $region43: #{tpu_custom_call.1} parent=5 // pred_region
        %s1652 = ssub.s32 %s15, 2
        // Predicated region
        $region45: #{tpu_custom_call.1} parent=43 // pred_check
          %p1653 = pneg %p128
        $region46: #{tpu_custom_call.1} parent=43 // pred_check_branch
          %1655 = sbr.rel (%p1653) target = $region48
        $region47: #{tpu_custom_call.1} parent=43 // pred_region
          %s1656 = sand.u32 %s113, 1
          %s1657 = scalar_lea.sflag [#allocation4], %s1656
          %s1658 = sand.u32 %s113, 1
          %s1659 = smul.addr %s1658, 256
          %s1660 = scalar_lea.vmem [#allocation5], %s1659
          %1661 = dma.done %s1657, 4096
        $region48: #{tpu_custom_call.1} parent=43 // pred_fallthru
          _
      $region44: #{tpu_custom_call.1} parent=5 // pred_fallthru
        _
    $region6: #{tpu_custom_call.1} parent=1 // loop_footer
      %s19 = sadd.s32 1, %s15
    $region7: #{tpu_custom_call.1} parent=1 // loop_footer_branch
      %14 = sbr.rel target = $region3
    $region8: #{tpu_custom_call.1} parent=1 // loop_exit
      _
    %1662 = vsyncpa [#allocation3], 1
    %s1663 = scalar_lea.sflag [#allocation3], 1
    %1664 = vsyncpa %s1663, 1
    %1665 = vsyncpa [#allocation4], 1
    %s1666 = scalar_lea.sflag [#allocation4], 1
    %1667 = vsyncpa %s1666, 1

</llo_original>
